<compile_context>
chip_gen: v7x
topology: tpu7x:2x2x1
jax: 0.10.0
libtpu: 0.0.40
codegen_flags: <defaults>
</compile_context>

<pallas_src>
import functools
import math

import jax
import jax.numpy as jnp
from jax.experimental import pallas as pl
from jax.experimental.pallas import tpu as pltpu

LN_EPS = 1e-5          # nn.LayerNorm default
MASK_FILL = -1e10      # matches masked_fill(mask == 0, -1e10)


def _compute_vmem_limit():
    # Generation-aware VMEM budget: ~7/8 of physical VMEM (v7x: ~56 MiB of 64,
    # v5e/v6e: ~112 MiB of 128), leaving headroom for Mosaic internal scratch.
    try:
        cap = int(pltpu.get_tpu_info().vmem_capacity_bytes)
        return (cap * 7) // 8
    except Exception:
        return 48 * 1024 * 1024   # conservative fallback (fits every generation)


VMEM_LIMIT = _compute_vmem_limit()


def _round_up(x, m):
    return ((x + m - 1) // m) * m


def _row_grid(rows, tile_rows):
    # Row tile: multiple of 16 (bf16 sublane packing for the bf16 intermediates).
    tm = min(tile_rows, _round_up(rows, 16))
    tm = _round_up(tm, 16)
    rows_p = _round_up(rows, tm)
    # Prefer >= 2 grid steps along the "parallel" axis (v7x has 2 TensorCores per chip).
    if rows_p // tm == 1 and tm % 32 == 0:
        tm //= 2
        rows_p = _round_up(rows, tm)
    return tm, rows_p


def _pad_rows(a, rows_p):
    pad = rows_p - a.shape[0]
    if pad == 0:
        return a
    return jnp.pad(a, ((0, pad), (0, 0)))


# --------------------------------------------------------------------------- kernels ---

def _qkv_kernel(x_ref, w_ref, b_ref, q_ref, k_ref, v_ref, *, d_model):
    # One fused (tm, D) x (D, 3D) GEMM on the MXU (bf16 operands, f32 accumulation),
    # bias add in f32, then split into the three bf16 outputs along the lane dim.
    xb = x_ref[...].astype(jnp.bfloat16)
    qkv = (jnp.dot(xb, w_ref[...], preferred_element_type=jnp.float32)
           + b_ref[...]).astype(q_ref.dtype)
    D = d_model
    q_ref[...] = qkv[:, :D]
    k_ref[...] = qkv[:, D:2 * D]
    v_ref[...] = qkv[:, 2 * D:]


def _attention_kernel(q_ref, k_ref, v_ref, mask_ref, o_ref, *, scale):
    # One grid step == one batch element, all heads at once (lane-dense tiles).
    q = q_ref[...]                                    # (H, S, DK) bf16
    k = k_ref[...]
    v = v_ref[...]
    scores = jnp.einsum("hqd,hkd->hqk", q, k,
                        preferred_element_type=jnp.float32) * scale   # (H, S, S) f32
    keep = mask_ref[...]                              # (1, S) key mask, broadcast over rows
    scores = jnp.where(keep == 0, MASK_FILL, scores)
    m = jnp.max(scores, axis=-1, keepdims=True)
    e = jnp.exp(scores - m)
    denom = jnp.sum(e, axis=-1, keepdims=True)
    probs = e * pl.reciprocal(denom, approx=True)     # divide on the EUP slot
    out = jnp.einsum("hqk,hkd->hqd", probs.astype(jnp.bfloat16), v,
                     preferred_element_type=jnp.float32)
    o_ref[...] = out.astype(o_ref.dtype)
    # TODO(synk): for S >~ 1-2K switch to a KV-tiled online-softmax (flash) variant so the
    # full (S, S) f32 score tile never has to be resident in VMEM (v7x has only 64 MiB).


def _layer_norm(h, gamma, beta):
    mean = jnp.mean(h, axis=-1, keepdims=True)
    c = h - mean
    var = jnp.mean(c * c, axis=-1, keepdims=True)
    return c * jax.lax.rsqrt(var + LN_EPS) * gamma + beta


def _epilogue_kernel(a_ref, x_ref, wo_ref, bo_ref, g1_ref, beta1_ref,
                     w1_ref, b1_ref, w2_ref, b2_ref, g2_ref, beta2_ref, o_ref):
    # att_block Connection + FeedForward + ff_block Connection fused per row tile;
    # y1 stays in VMEM/vregs. Dropout layers are the identity in eval mode.
    proj = jnp.dot(a_ref[...], wo_ref[...], preferred_element_type=jnp.float32)
    y1 = _layer_norm(x_ref[...] + proj + bo_ref[...], g1_ref[...], beta1_ref[...])
    h1 = jnp.dot(y1.astype(jnp.bfloat16), w1_ref[...],
                 preferred_element_type=jnp.float32) + b1_ref[...]
    h1 = jnp.maximum(h1, 0.0)
    h2 = jnp.dot(h1.astype(jnp.bfloat16), w2_ref[...],
                 preferred_element_type=jnp.float32) + b2_ref[...]
    o_ref[...] = _layer_norm(y1 + h2, g2_ref[...], beta2_ref[...]).astype(o_ref.dtype)
    # TODO(synk): for large d_ff, tile the F dimension (accumulate W2 partials into a
    # (tm, D) f32 scratch) instead of keeping the full (tm, F) h1 live; for very large D on
    # v7x also single-buffer the grid-invariant weight specs (pipeline_mode=pl.Buffered(1)).
    # TODO(synk): training-mode dropout would use pltpu.prng_seed + pltpu.stateful_bernoulli
    # with 1/(1-p) scaling; here it is the identity (eval mode).


# -------------------------------------------------------------------------- wrappers ---

def _qkv_proj(xp, w_qkv, b_qkv, *, tm, d_model):
    rows_p, D = xp.shape
    row_spec = pl.BlockSpec((tm, D), lambda i: (i, 0))
    w_spec = pl.BlockSpec((D, 3 * D), lambda i: (0, 0))
    b_spec = pl.BlockSpec((1, 3 * D), lambda i: (0, 0))
    cost = pl.CostEstimate(
        flops=2 * rows_p * D * 3 * D,
        transcendentals=0,
        bytes_accessed=rows_p * D * 4 + 3 * D * D * 2 + 3 * D * 4 + 3 * rows_p * D * 2)
    return pl.pallas_call(
        functools.partial(_qkv_kernel, d_model=d_model),
        out_shape=[jax.ShapeDtypeStruct((rows_p, D), jnp.bfloat16)] * 3,
        grid_spec=pltpu.PrefetchScalarGridSpec(
            num_scalar_prefetch=0,
            grid=(rows_p // tm,),
            in_specs=[row_spec, w_spec, b_spec],
            out_specs=[row_spec, row_spec, row_spec],
        ),
        compiler_params=pltpu.CompilerParams(
            dimension_semantics=("parallel",),
            vmem_limit_bytes=VMEM_LIMIT),
        cost_estimate=cost,
    )(xp, w_qkv, b_qkv)


def _attention(q4, k4, v4, mask3, *, d_k):
    B, H, S, DK = q4.shape
    scale = 1.0 / math.sqrt(d_k)
    qkv_spec = pl.BlockSpec((None, H, S, DK), lambda b: (b, 0, 0, 0))
    mask_spec = pl.BlockSpec((None, 1, S), lambda b: (b, 0, 0))
    cost = pl.CostEstimate(
        flops=B * H * (4 * S * S * DK + 6 * S * S),
        transcendentals=B * H * S * S,
        bytes_accessed=4 * B * H * S * DK * 2 + B * S * 4)
    return pl.pallas_call(
        functools.partial(_attention_kernel, scale=scale),
        out_shape=jax.ShapeDtypeStruct((B, H, S, DK), jnp.bfloat16),
        grid_spec=pltpu.PrefetchScalarGridSpec(
            num_scalar_prefetch=0,
            grid=(B,),
            in_specs=[qkv_spec, qkv_spec, qkv_spec, mask_spec],
            out_specs=qkv_spec,
        ),
        compiler_params=pltpu.CompilerParams(
            dimension_semantics=("parallel",),
            vmem_limit_bytes=VMEM_LIMIT),
        cost_estimate=cost,
    )(q4, k4, v4, mask3)


def _fused_epilogue(ap, xp, wo, bo, ln1_g, ln1_b, w1, b1, w2, b2, ln2_g, ln2_b, *, tm):
    rows_p, D = xp.shape
    F = w1.shape[1]
    row_spec = pl.BlockSpec((tm, D), lambda i: (i, 0))
    wo_spec = pl.BlockSpec((D, D), lambda i: (0, 0))
    w1_spec = pl.BlockSpec((D, F), lambda i: (0, 0))
    w2_spec = pl.BlockSpec((F, D), lambda i: (0, 0))
    vD_spec = pl.BlockSpec((1, D), lambda i: (0, 0))
    vF_spec = pl.BlockSpec((1, F), lambda i: (0, 0))
    cost = pl.CostEstimate(
        flops=2 * rows_p * D * D + 4 * rows_p * D * F + 24 * rows_p * D,
        transcendentals=2 * rows_p,
        bytes_accessed=(rows_p * D * (2 + 4 + 4) + (D * D + 2 * D * F) * 2
                        + (5 * D + F) * 4))
    return pl.pallas_call(
        _epilogue_kernel,
        out_shape=jax.ShapeDtypeStruct((rows_p, D), jnp.float32),
        grid_spec=pltpu.PrefetchScalarGridSpec(
            num_scalar_prefetch=0,
            grid=(rows_p // tm,),
            in_specs=[row_spec, row_spec, wo_spec, vD_spec, vD_spec, vD_spec,
                      w1_spec, vF_spec, w2_spec, vD_spec, vD_spec, vD_spec],
            out_specs=row_spec,
        ),
        compiler_params=pltpu.CompilerParams(
            dimension_semantics=("parallel",),
            vmem_limit_bytes=VMEM_LIMIT),
        cost_estimate=cost,
    )(ap, xp, wo, bo, ln1_g, ln1_b, w1, b1, w2, b2, ln2_g, ln2_b)


@functools.partial(jax.jit, static_argnames=("num_heads", "tile_rows"))
def encoder_layer_forward(x, mask, params, *, num_heads, tile_rows=256):
    """x: (B, S, D) f32, mask: (B, S) key mask (1 = attend, 0 = masked)."""
    B, S, D = x.shape
    H = num_heads
    DK = D // H
    rows = B * S
    tm, rows_p = _row_grid(rows, tile_rows)

    x2d = x.reshape(rows, D).astype(jnp.float32)
    xp = _pad_rows(x2d, rows_p)        # pad once; reused as the residual input (no-op here)

    def w16(w):   # MXU operands in bf16 (f32 accumulation happens in the kernels)
        return w.astype(jnp.bfloat16)

    def row(b):   # biases / LN params stay f32
        return b.reshape(1, -1).astype(jnp.float32)

    # Fused QKV weight: (D, 3D) bf16, bias (1, 3D) f32.
    w_qkv = jnp.concatenate([w16(params["wq"]), w16(params["wk"]), w16(params["wv"])], axis=1)
    b_qkv = jnp.concatenate([row(params["bq"]), row(params["bk"]), row(params["bv"])], axis=1)

    q2d, k2d, v2d = _qkv_proj(xp, w_qkv, b_qkv, tm=tm, d_model=D)   # bf16 intermediates
    if rows_p != rows:
        q2d, k2d, v2d = q2d[:rows], k2d[:rows], v2d[:rows]

    # Same (unusual) head split as the PyTorch .view: plain row-major reshape, no transpose.
    # TODO(synk): for moderate S*D, fuse QKV + attention per batch and do this reshape on
    # the VMEM value to avoid the bf16 HBM round trip and relayout copies entirely.
    q4 = q2d.reshape(B, H, S, DK)
    k4 = k2d.reshape(B, H, S, DK)
    v4 = v2d.reshape(B, H, S, DK)
    mask3 = mask.reshape(B, 1, S).astype(jnp.int32)

    att = _attention(q4, k4, v4, mask3, d_k=DK)       # (B, H, S, DK) bf16
    att2d = _pad_rows(att.reshape(rows, D), rows_p)

    y2 = _fused_epilogue(att2d, xp,
                         w16(params["wo"]), row(params["bo"]),
                         row(params["ln1_g"]), row(params["ln1_b"]),
                         w16(params["w1"]), row(params["b1"]),
                         w16(params["w2"]), row(params["b2"]),
                         row(params["ln2_g"]), row(params["ln2_b"]), tm=tm)
    if rows_p != rows:
        y2 = y2[:rows]
    return y2.reshape(B, S, D)


# ------------------------------------------------------------------------- reference ---

def _reference(x, mask, params, num_heads):
    """Pure-JAX EncoderLayer forward mirroring the kernel numerics (bf16 MXU operands)."""
    B, S, D = x.shape
    H = num_heads
    DK = D // H

    def mm(a, w):
        return jnp.dot(a.astype(jnp.bfloat16), w.astype(jnp.bfloat16),
                       preferred_element_type=jnp.float32)

    def ln(h, g, b):
        mean = jnp.mean(h, axis=-1, keepdims=True)
        var = jnp.mean((h - mean) ** 2, axis=-1, keepdims=True)
        return (h - mean) * jax.lax.rsqrt(var + LN_EPS) * g + b

    x2 = x.reshape(B * S, D).astype(jnp.float32)
    q = (mm(x2, params["wq"]) + params["bq"]).reshape(B, H, S, DK)
    k = (mm(x2, params["wk"]) + params["bk"]).reshape(B, H, S, DK)
    v = (mm(x2, params["wv"]) + params["bv"]).reshape(B, H, S, DK)
    scores = jnp.einsum("bhqd,bhkd->bhqk",
                        q.astype(jnp.bfloat16), k.astype(jnp.bfloat16),
                        preferred_element_type=jnp.float32) / math.sqrt(DK)
    scores = jnp.where(mask[:, None, None, :] == 0, MASK_FILL, scores)
    probs = jax.nn.softmax(scores, axis=-1)
    att = jnp.einsum("bhqk,bhkd->bhqd",
                     probs.astype(jnp.bfloat16), v.astype(jnp.bfloat16),
                     preferred_element_type=jnp.float32).reshape(B * S, D)
    y1 = ln(x2 + mm(att, params["wo"]) + params["bo"],
            params["ln1_g"], params["ln1_b"])
    h1 = jnp.maximum(mm(y1, params["w1"]) + params["b1"], 0.0)
    y2 = ln(y1 + mm(h1, params["w2"]) + params["b2"],
            params["ln2_g"], params["ln2_b"])
    return y2.reshape(B, S, D)


if __name__ == "__main__":
    batch, seq, d_model, d_ff, num_heads = 2, 8, 128, 256, 4

    key = jax.random.PRNGKey(0)
    keys = jax.random.split(key, 13)

    x = jax.random.normal(keys[0], (batch, seq, d_model), dtype=jnp.float32)

    def linear_init(kw, kb, fan_in, fan_out):
        lim = 1.0 / math.sqrt(fan_in)
        w = jax.random.uniform(kw, (fan_in, fan_out), jnp.float32, -lim, lim)
        b = jax.random.uniform(kb, (fan_out,), jnp.float32, -lim, lim)
        return w, b

    wq, bq = linear_init(keys[1], keys[2], d_model, d_model)
    wk, bk = linear_init(keys[3], keys[4], d_model, d_model)
    wv, bv = linear_init(keys[5], keys[6], d_model, d_model)
    wo, bo = linear_init(keys[7], keys[8], d_model, d_model)
    w1, b1 = linear_init(keys[9], keys[10], d_model, d_ff)
    w2, b2 = linear_init(keys[11], keys[12], d_ff, d_model)

    params = dict(
        wq=wq, bq=bq, wk=wk, bk=bk, wv=wv, bv=bv, wo=wo, bo=bo,
        w1=w1, b1=b1, w2=w2, b2=b2,
        ln1_g=jnp.ones((d_model,), jnp.float32),
        ln1_b=jnp.zeros((d_model,), jnp.float32),
        ln2_g=jnp.ones((d_model,), jnp.float32),
        ln2_b=jnp.zeros((d_model,), jnp.float32),
    )

    # Key mask (1 = attend, 0 = masked): mask out the last two key positions of batch 1.
    mask = jnp.ones((batch, seq), jnp.int32).at[1, -2:].set(0)

    out = encoder_layer_forward(x, mask, params, num_heads=num_heads)
    jax.block_until_ready(out)

    ref = _reference(x, mask, params, num_heads)
    assert out.shape == (batch, seq, d_model)
    max_err = float(jnp.max(jnp.abs(out - ref)))
    assert jnp.allclose(out, ref, atol=2e-2, rtol=2e-2), \
        f"mismatch vs reference, max_err={max_err}"

    print("KERNEL_OK")
</pallas_src>

<mosaic_0001>
module attributes {stable_mosaic.version = 11 : i64} {
  func.func @_qkv_kernel(%arg0: i32, %arg1: memref<16x128xf32, #tpu.memory_space<vmem>>, %arg2: memref<128x384xbf16, #tpu.memory_space<vmem>>, %arg3: memref<1x384xf32, #tpu.memory_space<vmem>>, %arg4: memref<16x128xbf16, #tpu.memory_space<vmem>>, %arg5: memref<16x128xbf16, #tpu.memory_space<vmem>>, %arg6: memref<16x128xbf16, #tpu.memory_space<vmem>>) attributes {dimension_semantics = [#tpu.dimension_semantics<parallel>], iteration_bounds = array<i64: 1>, scalar_prefetch = 0 : i64, scratch_operands = 0 : i64, tpu.core_type = #tpu.core_type<tc>, window_params = [{transform_indices = @transform_0, window_bounds = array<i64: 16, 128>}, {pipeline_mode = #tpu.pipeline_mode<synchronous>, transform_indices = @transform_1, window_bounds = array<i64: 128, 384>}, {pipeline_mode = #tpu.pipeline_mode<synchronous>, transform_indices = @transform_2, window_bounds = array<i64: 1, 384>}, {transform_indices = @transform_3, window_bounds = array<i64: 16, 128>}, {transform_indices = @transform_4, window_bounds = array<i64: 16, 128>}, {transform_indices = @transform_5, window_bounds = array<i64: 16, 128>}]} {
    %c0 = arith.constant 0 : index
    %c0_0 = arith.constant 0 : index
    %0 = vector.load %arg1[%c0, %c0_0] : memref<16x128xf32, #tpu.memory_space<vmem>>, vector<16x128xf32>
    %1 = arith.truncf %0 : vector<16x128xf32> to vector<16x128xbf16>
    %c0_1 = arith.constant 0 : index
    %c0_2 = arith.constant 0 : index
    %2 = vector.load %arg2[%c0_1, %c0_2] : memref<128x384xbf16, #tpu.memory_space<vmem>>, vector<128x384xbf16>
    %cst = arith.constant dense<0.000000e+00> : vector<16x384xf32>
    %3 = tpu.matmul %1, %2, %cst {dimension_numbers = #tpu.dot_dimension_numbers<[1], [0], [0], [1], [0, 0, 1, 1], [], []>} : vector<16x128xbf16>, vector<128x384xbf16>, vector<16x384xf32> -> vector<16x384xf32>
    %c0_3 = arith.constant 0 : index
    %c0_4 = arith.constant 0 : index
    %4 = vector.load %arg3[%c0_3, %c0_4] : memref<1x384xf32, #tpu.memory_space<vmem>>, vector<1x384xf32>
    %5 = vector.broadcast %4 : vector<1x384xf32> to vector<16x384xf32>
    %6 = arith.addf %3, %5 : vector<16x384xf32>
    %7 = arith.truncf %6 : vector<16x384xf32> to vector<16x384xbf16>
    %8 = vector.extract_strided_slice %7 {offsets = [0, 0], sizes = [16, 128], strides = [1, 1]} : vector<16x384xbf16> to vector<16x128xbf16>
    %c0_5 = arith.constant 0 : index
    %c0_6 = arith.constant 0 : index
    %9 = vector.load %arg4[%c0_5, %c0_6] : memref<16x128xbf16, #tpu.memory_space<vmem>>, vector<16x128xbf16>
    tpu.vector_store %arg4[%c0_5, %c0_6], %8 {strides = array<i32>} : memref<16x128xbf16, #tpu.memory_space<vmem>>, vector<16x128xbf16>,
    %10 = vector.extract_strided_slice %7 {offsets = [0, 128], sizes = [16, 128], strides = [1, 1]} : vector<16x384xbf16> to vector<16x128xbf16>
    %c0_7 = arith.constant 0 : index
    %c0_8 = arith.constant 0 : index
    %11 = vector.load %arg5[%c0_7, %c0_8] : memref<16x128xbf16, #tpu.memory_space<vmem>>, vector<16x128xbf16>
    tpu.vector_store %arg5[%c0_7, %c0_8], %10 {strides = array<i32>} : memref<16x128xbf16, #tpu.memory_space<vmem>>, vector<16x128xbf16>,
    %12 = vector.extract_strided_slice %7 {offsets = [0, 256], sizes = [16, 128], strides = [1, 1]} : vector<16x384xbf16> to vector<16x128xbf16>
    %c0_9 = arith.constant 0 : index
    %c0_10 = arith.constant 0 : index
    %13 = vector.load %arg6[%c0_9, %c0_10] : memref<16x128xbf16, #tpu.memory_space<vmem>>, vector<16x128xbf16>
    tpu.vector_store %arg6[%c0_9, %c0_10], %12 {strides = array<i32>} : memref<16x128xbf16, #tpu.memory_space<vmem>>, vector<16x128xbf16>,
    return
  }
  func.func @transform_0(%arg0: i32) -> (i32, i32) {
    %c0_i32 = arith.constant 0 : i32
    %c0_i32_0 = arith.constant 0 : i32
    return %arg0, %c0_i32 : i32, i32
  }
  func.func @transform_1(%arg0: i32) -> (i32, i32) {
    %c0_i32 = arith.constant 0 : i32
    %c0_i32_0 = arith.constant 0 : i32
    %c0_i32_1 = arith.constant 0 : i32
    return %c0_i32, %c0_i32_0 : i32, i32
  }
  func.func @transform_2(%arg0: i32) -> (i32, i32) {
    %c0_i32 = arith.constant 0 : i32
    %c0_i32_0 = arith.constant 0 : i32
    %c0_i32_1 = arith.constant 0 : i32
    return %c0_i32, %c0_i32_0 : i32, i32
  }
  func.func @transform_3(%arg0: i32) -> (i32, i32) {
    %c0_i32 = arith.constant 0 : i32
    %c0_i32_0 = arith.constant 0 : i32
    return %arg0, %c0_i32 : i32, i32
  }
  func.func @transform_4(%arg0: i32) -> (i32, i32) {
    %c0_i32 = arith.constant 0 : i32
    %c0_i32_0 = arith.constant 0 : i32
    return %arg0, %c0_i32 : i32, i32
  }
  func.func @transform_5(%arg0: i32) -> (i32, i32) {
    %c0_i32 = arith.constant 0 : i32
    %c0_i32_0 = arith.constant 0 : i32
    return %arg0, %c0_i32 : i32, i32
  }
}

module attributes {stable_mosaic.version = 11 : i64} {
  func.func @_attention_kernel(%arg0: i32, %arg1: memref<1x4x8x32xbf16, #tpu.memory_space<vmem>>, %arg2: memref<1x4x8x32xbf16, #tpu.memory_space<vmem>>, %arg3: memref<1x4x8x32xbf16, #tpu.memory_space<vmem>>, %arg4: memref<1x1x8xi32, #tpu.memory_space<vmem>>, %arg5: memref<1x4x8x32xbf16, #tpu.memory_space<vmem>>) attributes {dimension_semantics = [#tpu.dimension_semantics<parallel>], iteration_bounds = array<i64: 2>, scalar_prefetch = 0 : i64, scratch_operands = 0 : i64, tpu.core_type = #tpu.core_type<tc>, window_params = [{transform_indices = @transform_0, window_bounds = array<i64: 1, 4, 8, 32>}, {transform_indices = @transform_1, window_bounds = array<i64: 1, 4, 8, 32>}, {transform_indices = @transform_2, window_bounds = array<i64: 1, 4, 8, 32>}, {transform_indices = @transform_3, window_bounds = array<i64: 1, 1, 8>}, {transform_indices = @transform_4, window_bounds = array<i64: 1, 4, 8, 32>}]} {
    %c0 = arith.constant 0 : index
    %c0_0 = arith.constant 0 : index
    %c0_1 = arith.constant 0 : index
    %c0_2 = arith.constant 0 : index
    %0 = vector.load %arg1[%c0, %c0_0, %c0_1, %c0_2] : memref<1x4x8x32xbf16, #tpu.memory_space<vmem>>, vector<1x4x8x32xbf16>
    %1 = vector.shape_cast %0 : vector<1x4x8x32xbf16> to vector<4x8x32xbf16>
    %c0_3 = arith.constant 0 : index
    %c0_4 = arith.constant 0 : index
    %c0_5 = arith.constant 0 : index
    %c0_6 = arith.constant 0 : index
    %2 = vector.load %arg2[%c0_3, %c0_4, %c0_5, %c0_6] : memref<1x4x8x32xbf16, #tpu.memory_space<vmem>>, vector<1x4x8x32xbf16>
    %3 = vector.shape_cast %2 : vector<1x4x8x32xbf16> to vector<4x8x32xbf16>
    %c0_7 = arith.constant 0 : index
    %c0_8 = arith.constant 0 : index
    %c0_9 = arith.constant 0 : index
    %c0_10 = arith.constant 0 : index
    %4 = vector.load %arg3[%c0_7, %c0_8, %c0_9, %c0_10] : memref<1x4x8x32xbf16, #tpu.memory_space<vmem>>, vector<1x4x8x32xbf16>
    %5 = vector.shape_cast %4 : vector<1x4x8x32xbf16> to vector<4x8x32xbf16>
    "tpu.trace_start"() <{level = 10 : i32, message = "hqd,hkd->hqk"}> : () -> ()
    %cst = arith.constant dense<0.000000e+00> : vector<4x8x8xf32>
    %6 = tpu.matmul %1, %3, %cst {dimension_numbers = #tpu.dot_dimension_numbers<[2], [2], [1], [1], [0, 0, 0, 1, 1, 1], [0], [0]>} : vector<4x8x32xbf16>, vector<4x8x32xbf16>, vector<4x8x8xf32> -> vector<4x8x8xf32>
    "tpu.trace_stop"() : () -> ()
    %cst_11 = arith.constant 0.176776692 : f32
    %7 = vector.broadcast %cst_11 : f32 to vector<4x8x8xf32>
    %8 = arith.mulf %6, %7 : vector<4x8x8xf32>
    %c0_12 = arith.constant 0 : index
    %c0_13 = arith.constant 0 : index
    %c0_14 = arith.constant 0 : index
    %9 = vector.load %arg4[%c0_12, %c0_13, %c0_14] : memref<1x1x8xi32, #tpu.memory_space<vmem>>, vector<1x1x8xi32>
    %10 = vector.shape_cast %9 : vector<1x1x8xi32> to vector<1x8xi32>
    %c0_i32 = arith.constant 0 : i32
    %11 = vector.broadcast %c0_i32 : i32 to vector<1x8xi32>
    %12 = arith.cmpi eq, %10, %11 : vector<1x8xi32>
    %cst_15 = arith.constant -1.000000e+10 : f32
    %13 = vector.shape_cast %12 : vector<1x8xi1> to vector<1x1x8xi1>
    %14 = vector.broadcast %13 : vector<1x1x8xi1> to vector<4x8x8xi1>
    %15 = vector.broadcast %cst_15 : f32 to vector<4x8x8xf32>
    %16 = arith.select %14, %15, %8 : vector<4x8x8xi1>, vector<4x8x8xf32>
    %cst_16 = arith.constant dense<0xFF800000> : vector<4x8xf32>
    %17 = vector.multi_reduction <maximumf>, %16, %cst_16 [2] : vector<4x8x8xf32> to vector<4x8xf32>
    %18 = vector.shape_cast %17 : vector<4x8xf32> to vector<4x8x1xf32>
    %19 = vector.broadcast %18 : vector<4x8x1xf32> to vector<4x8x8xf32>
    %20 = arith.subf %16, %19 : vector<4x8x8xf32>
    %21 = math.exp %20 : vector<4x8x8xf32>
    %cst_17 = arith.constant dense<0.000000e+00> : vector<4x8xf32>
    %22 = vector.multi_reduction <add>, %21, %cst_17 [2] : vector<4x8x8xf32> to vector<4x8xf32>
    %23 = vector.shape_cast %22 : vector<4x8xf32> to vector<4x8x1xf32>
    %24 = tpu.reciprocal %23 {approx = true} : vector<4x8x1xf32> -> vector<4x8x1xf32>
    %25 = vector.broadcast %24 : vector<4x8x1xf32> to vector<4x8x8xf32>
    %26 = arith.mulf %21, %25 : vector<4x8x8xf32>
    %27 = arith.truncf %26 : vector<4x8x8xf32> to vector<4x8x8xbf16>
    "tpu.trace_start"() <{level = 10 : i32, message = "hqk,hkd->hqd"}> : () -> ()
    %cst_18 = arith.constant dense<0.000000e+00> : vector<4x8x32xf32>
    %28 = tpu.matmul %27, %5, %cst_18 {dimension_numbers = #tpu.dot_dimension_numbers<[2], [1], [1], [2], [0, 0, 0, 1, 1, 2], [0], [0]>} : vector<4x8x8xbf16>, vector<4x8x32xbf16>, vector<4x8x32xf32> -> vector<4x8x32xf32>
    "tpu.trace_stop"() : () -> ()
    %29 = arith.truncf %28 : vector<4x8x32xf32> to vector<4x8x32xbf16>
    %c0_19 = arith.constant 0 : index
    %c0_20 = arith.constant 0 : index
    %c0_21 = arith.constant 0 : index
    %c0_22 = arith.constant 0 : index
    %30 = vector.load %arg5[%c0_19, %c0_20, %c0_21, %c0_22] : memref<1x4x8x32xbf16, #tpu.memory_space<vmem>>, vector<1x4x8x32xbf16>
    %31 = vector.shape_cast %30 : vector<1x4x8x32xbf16> to vector<4x8x32xbf16>
    %32 = vector.shape_cast %29 : vector<4x8x32xbf16> to vector<1x4x8x32xbf16>
    tpu.vector_store %arg5[%c0_19, %c0_20, %c0_21, %c0_22], %32 {strides = array<i32>} : memref<1x4x8x32xbf16, #tpu.memory_space<vmem>>, vector<1x4x8x32xbf16>,
    return
  }
  func.func @transform_0(%arg0: i32) -> (i32, i32, i32, i32) {
    %c0_i32 = arith.constant 0 : i32
    %c0_i32_0 = arith.constant 0 : i32
    %c0_i32_1 = arith.constant 0 : i32
    %c0_i32_2 = arith.constant 0 : i32
    return %arg0, %c0_i32, %c0_i32_0, %c0_i32_1 : i32, i32, i32, i32
  }
  func.func @transform_1(%arg0: i32) -> (i32, i32, i32, i32) {
    %c0_i32 = arith.constant 0 : i32
    %c0_i32_0 = arith.constant 0 : i32
    %c0_i32_1 = arith.constant 0 : i32
    %c0_i32_2 = arith.constant 0 : i32
    return %arg0, %c0_i32, %c0_i32_0, %c0_i32_1 : i32, i32, i32, i32
  }
  func.func @transform_2(%arg0: i32) -> (i32, i32, i32, i32) {
    %c0_i32 = arith.constant 0 : i32
    %c0_i32_0 = arith.constant 0 : i32
    %c0_i32_1 = arith.constant 0 : i32
    %c0_i32_2 = arith.constant 0 : i32
    return %arg0, %c0_i32, %c0_i32_0, %c0_i32_1 : i32, i32, i32, i32
  }
  func.func @transform_3(%arg0: i32) -> (i32, i32, i32) {
    %c0_i32 = arith.constant 0 : i32
    %c0_i32_0 = arith.constant 0 : i32
    %c0_i32_1 = arith.constant 0 : i32
    return %arg0, %c0_i32, %c0_i32_0 : i32, i32, i32
  }
  func.func @transform_4(%arg0: i32) -> (i32, i32, i32, i32) {
    %c0_i32 = arith.constant 0 : i32
    %c0_i32_0 = arith.constant 0 : i32
    %c0_i32_1 = arith.constant 0 : i32
    %c0_i32_2 = arith.constant 0 : i32
    return %arg0, %c0_i32, %c0_i32_0, %c0_i32_1 : i32, i32, i32, i32
  }
}

module attributes {stable_mosaic.version = 11 : i64} {
  func.func @_epilogue_kernel(%arg0: i32, %arg1: memref<16x128xbf16, #tpu.memory_space<vmem>>, %arg2: memref<16x128xf32, #tpu.memory_space<vmem>>, %arg3: memref<128x128xbf16, #tpu.memory_space<vmem>>, %arg4: memref<1x128xf32, #tpu.memory_space<vmem>>, %arg5: memref<1x128xf32, #tpu.memory_space<vmem>>, %arg6: memref<1x128xf32, #tpu.memory_space<vmem>>, %arg7: memref<128x256xbf16, #tpu.memory_space<vmem>>, %arg8: memref<1x256xf32, #tpu.memory_space<vmem>>, %arg9: memref<256x128xbf16, #tpu.memory_space<vmem>>, %arg10: memref<1x128xf32, #tpu.memory_space<vmem>>, %arg11: memref<1x128xf32, #tpu.memory_space<vmem>>, %arg12: memref<1x128xf32, #tpu.memory_space<vmem>>, %arg13: memref<16x128xf32, #tpu.memory_space<vmem>>) attributes {dimension_semantics = [#tpu.dimension_semantics<parallel>], iteration_bounds = array<i64: 1>, scalar_prefetch = 0 : i64, scratch_operands = 0 : i64, tpu.core_type = #tpu.core_type<tc>, window_params = [{transform_indices = @transform_0, window_bounds = array<i64: 16, 128>}, {transform_indices = @transform_1, window_bounds = array<i64: 16, 128>}, {pipeline_mode = #tpu.pipeline_mode<synchronous>, transform_indices = @transform_2, window_bounds = array<i64: 128, 128>}, {pipeline_mode = #tpu.pipeline_mode<synchronous>, transform_indices = @transform_3, window_bounds = array<i64: 1, 128>}, {pipeline_mode = #tpu.pipeline_mode<synchronous>, transform_indices = @transform_4, window_bounds = array<i64: 1, 128>}, {pipeline_mode = #tpu.pipeline_mode<synchronous>, transform_indices = @transform_5, window_bounds = array<i64: 1, 128>}, {pipeline_mode = #tpu.pipeline_mode<synchronous>, transform_indices = @transform_6, window_bounds = array<i64: 128, 256>}, {pipeline_mode = #tpu.pipeline_mode<synchronous>, transform_indices = @transform_7, window_bounds = array<i64: 1, 256>}, {pipeline_mode = #tpu.pipeline_mode<synchronous>, transform_indices = @transform_8, window_bounds = array<i64: 256, 128>}, {pipeline_mode = #tpu.pipeline_mode<synchronous>, transform_indices = @transform_9, window_bounds = array<i64: 1, 128>}, {pipeline_mode = #tpu.pipeline_mode<synchronous>, transform_indices = @transform_10, window_bounds = array<i64: 1, 128>}, {pipeline_mode = #tpu.pipeline_mode<synchronous>, transform_indices = @transform_11, window_bounds = array<i64: 1, 128>}, {transform_indices = @transform_12, window_bounds = array<i64: 16, 128>}]} {
    %c0 = arith.constant 0 : index
    %c0_0 = arith.constant 0 : index
    %0 = vector.load %arg1[%c0, %c0_0] : memref<16x128xbf16, #tpu.memory_space<vmem>>, vector<16x128xbf16>
    %c0_1 = arith.constant 0 : index
    %c0_2 = arith.constant 0 : index
    %1 = vector.load %arg3[%c0_1, %c0_2] : memref<128x128xbf16, #tpu.memory_space<vmem>>, vector<128x128xbf16>
    %cst = arith.constant dense<0.000000e+00> : vector<16x128xf32>
    %2 = tpu.matmul %0, %1, %cst {dimension_numbers = #tpu.dot_dimension_numbers<[1], [0], [0], [1], [0, 0, 1, 1], [], []>} : vector<16x128xbf16>, vector<128x128xbf16>, vector<16x128xf32> -> vector<16x128xf32>
    %c0_3 = arith.constant 0 : index
    %c0_4 = arith.constant 0 : index
    %3 = vector.load %arg2[%c0_3, %c0_4] : memref<16x128xf32, #tpu.memory_space<vmem>>, vector<16x128xf32>
    %4 = arith.addf %3, %2 : vector<16x128xf32>
    %c0_5 = arith.constant 0 : index
    %c0_6 = arith.constant 0 : index
    %5 = vector.load %arg4[%c0_5, %c0_6] : memref<1x128xf32, #tpu.memory_space<vmem>>, vector<1x128xf32>
    %6 = vector.broadcast %5 : vector<1x128xf32> to vector<16x128xf32>
    %7 = arith.addf %4, %6 : vector<16x128xf32>
    %c0_7 = arith.constant 0 : index
    %c0_8 = arith.constant 0 : index
    %8 = vector.load %arg5[%c0_7, %c0_8] : memref<1x128xf32, #tpu.memory_space<vmem>>, vector<1x128xf32>
    %c0_9 = arith.constant 0 : index
    %c0_10 = arith.constant 0 : index
    %9 = vector.load %arg6[%c0_9, %c0_10] : memref<1x128xf32, #tpu.memory_space<vmem>>, vector<1x128xf32>
    %cst_11 = arith.constant dense<0.000000e+00> : vector<16xf32>
    %10 = vector.multi_reduction <add>, %7, %cst_11 [1] : vector<16x128xf32> to vector<16xf32>
    %11 = vector.shape_cast %10 : vector<16xf32> to vector<16x1xf32>
    %cst_12 = arith.constant 1.280000e+02 : f32
    %12 = vector.broadcast %cst_12 : f32 to vector<16x1xf32>
    %13 = arith.divf %11, %12 : vector<16x1xf32>
    %14 = vector.broadcast %13 : vector<16x1xf32> to vector<16x128xf32>
    %15 = arith.subf %7, %14 : vector<16x128xf32>
    %16 = arith.mulf %15, %15 : vector<16x128xf32>
    %cst_13 = arith.constant dense<0.000000e+00> : vector<16xf32>
    %17 = vector.multi_reduction <add>, %16, %cst_13 [1] : vector<16x128xf32> to vector<16xf32>
    %18 = vector.shape_cast %17 : vector<16xf32> to vector<16x1xf32>
    %cst_14 = arith.constant 1.280000e+02 : f32
    %19 = vector.broadcast %cst_14 : f32 to vector<16x1xf32>
    %20 = arith.divf %18, %19 : vector<16x1xf32>
    %cst_15 = arith.constant 9.99999974E-6 : f32
    %21 = vector.broadcast %cst_15 : f32 to vector<16x1xf32>
    %22 = arith.addf %20, %21 : vector<16x1xf32>
    %23 = math.rsqrt %22 : vector<16x1xf32>
    %24 = vector.broadcast %23 : vector<16x1xf32> to vector<16x128xf32>
    %25 = arith.mulf %15, %24 : vector<16x128xf32>
    %26 = vector.broadcast %8 : vector<1x128xf32> to vector<16x128xf32>
    %27 = arith.mulf %25, %26 : vector<16x128xf32>
    %28 = vector.broadcast %9 : vector<1x128xf32> to vector<16x128xf32>
    %29 = arith.addf %27, %28 : vector<16x128xf32>
    %30 = arith.truncf %29 : vector<16x128xf32> to vector<16x128xbf16>
    %c0_16 = arith.constant 0 : index
    %c0_17 = arith.constant 0 : index
    %31 = vector.load %arg7[%c0_16, %c0_17] : memref<128x256xbf16, #tpu.memory_space<vmem>>, vector<128x256xbf16>
    %cst_18 = arith.constant dense<0.000000e+00> : vector<16x256xf32>
    %32 = tpu.matmul %30, %31, %cst_18 {dimension_numbers = #tpu.dot_dimension_numbers<[1], [0], [0], [1], [0, 0, 1, 1], [], []>} : vector<16x128xbf16>, vector<128x256xbf16>, vector<16x256xf32> -> vector<16x256xf32>
    %c0_19 = arith.constant 0 : index
    %c0_20 = arith.constant 0 : index
    %33 = vector.load %arg8[%c0_19, %c0_20] : memref<1x256xf32, #tpu.memory_space<vmem>>, vector<1x256xf32>
    %34 = vector.broadcast %33 : vector<1x256xf32> to vector<16x256xf32>
    %35 = arith.addf %32, %34 : vector<16x256xf32>
    %cst_21 = arith.constant 0.000000e+00 : f32
    %36 = vector.broadcast %cst_21 : f32 to vector<16x256xf32>
    %37 = arith.maximumf %35, %36 : vector<16x256xf32>
    %38 = arith.truncf %37 : vector<16x256xf32> to vector<16x256xbf16>
    %c0_22 = arith.constant 0 : index
    %c0_23 = arith.constant 0 : index
    %39 = vector.load %arg9[%c0_22, %c0_23] : memref<256x128xbf16, #tpu.memory_space<vmem>>, vector<256x128xbf16>
    %cst_24 = arith.constant dense<0.000000e+00> : vector<16x128xf32>
    %40 = tpu.matmul %38, %39, %cst_24 {dimension_numbers = #tpu.dot_dimension_numbers<[1], [0], [0], [1], [0, 0, 1, 1], [], []>} : vector<16x256xbf16>, vector<256x128xbf16>, vector<16x128xf32> -> vector<16x128xf32>
    %c0_25 = arith.constant 0 : index
    %c0_26 = arith.constant 0 : index
    %41 = vector.load %arg10[%c0_25, %c0_26] : memref<1x128xf32, #tpu.memory_space<vmem>>, vector<1x128xf32>
    %42 = vector.broadcast %41 : vector<1x128xf32> to vector<16x128xf32>
    %43 = arith.addf %40, %42 : vector<16x128xf32>
    %44 = arith.addf %29, %43 : vector<16x128xf32>
    %c0_27 = arith.constant 0 : index
    %c0_28 = arith.constant 0 : index
    %45 = vector.load %arg11[%c0_27, %c0_28] : memref<1x128xf32, #tpu.memory_space<vmem>>, vector<1x128xf32>
    %c0_29 = arith.constant 0 : index
    %c0_30 = arith.constant 0 : index
    %46 = vector.load %arg12[%c0_29, %c0_30] : memref<1x128xf32, #tpu.memory_space<vmem>>, vector<1x128xf32>
    %cst_31 = arith.constant dense<0.000000e+00> : vector<16xf32>
    %47 = vector.multi_reduction <add>, %44, %cst_31 [1] : vector<16x128xf32> to vector<16xf32>
    %48 = vector.shape_cast %47 : vector<16xf32> to vector<16x1xf32>
    %cst_32 = arith.constant 1.280000e+02 : f32
    %49 = vector.broadcast %cst_32 : f32 to vector<16x1xf32>
    %50 = arith.divf %48, %49 : vector<16x1xf32>
    %51 = vector.broadcast %50 : vector<16x1xf32> to vector<16x128xf32>
    %52 = arith.subf %44, %51 : vector<16x128xf32>
    %53 = arith.mulf %52, %52 : vector<16x128xf32>
    %cst_33 = arith.constant dense<0.000000e+00> : vector<16xf32>
    %54 = vector.multi_reduction <add>, %53, %cst_33 [1] : vector<16x128xf32> to vector<16xf32>
    %55 = vector.shape_cast %54 : vector<16xf32> to vector<16x1xf32>
    %cst_34 = arith.constant 1.280000e+02 : f32
    %56 = vector.broadcast %cst_34 : f32 to vector<16x1xf32>
    %57 = arith.divf %55, %56 : vector<16x1xf32>
    %cst_35 = arith.constant 9.99999974E-6 : f32
    %58 = vector.broadcast %cst_35 : f32 to vector<16x1xf32>
    %59 = arith.addf %57, %58 : vector<16x1xf32>
    %60 = math.rsqrt %59 : vector<16x1xf32>
    %61 = vector.broadcast %60 : vector<16x1xf32> to vector<16x128xf32>
    %62 = arith.mulf %52, %61 : vector<16x128xf32>
    %63 = vector.broadcast %45 : vector<1x128xf32> to vector<16x128xf32>
    %64 = arith.mulf %62, %63 : vector<16x128xf32>
    %65 = vector.broadcast %46 : vector<1x128xf32> to vector<16x128xf32>
    %66 = arith.addf %64, %65 : vector<16x128xf32>
    %c0_36 = arith.constant 0 : index
    %c0_37 = arith.constant 0 : index
    %67 = vector.load %arg13[%c0_36, %c0_37] : memref<16x128xf32, #tpu.memory_space<vmem>>, vector<16x128xf32>
    tpu.vector_store %arg13[%c0_36, %c0_37], %66 {strides = array<i32>} : memref<16x128xf32, #tpu.memory_space<vmem>>, vector<16x128xf32>,
    return
  }
  func.func @transform_0(%arg0: i32) -> (i32, i32) {
    %c0_i32 = arith.constant 0 : i32
    %c0_i32_0 = arith.constant 0 : i32
    return %arg0, %c0_i32 : i32, i32
  }
  func.func @transform_1(%arg0: i32) -> (i32, i32) {
    %c0_i32 = arith.constant 0 : i32
    %c0_i32_0 = arith.constant 0 : i32
    return %arg0, %c0_i32 : i32, i32
  }
  func.func @transform_2(%arg0: i32) -> (i32, i32) {
    %c0_i32 = arith.constant 0 : i32
    %c0_i32_0 = arith.constant 0 : i32
    %c0_i32_1 = arith.constant 0 : i32
    return %c0_i32, %c0_i32_0 : i32, i32
  }
  func.func @transform_3(%arg0: i32) -> (i32, i32) {
    %c0_i32 = arith.constant 0 : i32
    %c0_i32_0 = arith.constant 0 : i32
    %c0_i32_1 = arith.constant 0 : i32
    return %c0_i32, %c0_i32_0 : i32, i32
  }
  func.func @transform_4(%arg0: i32) -> (i32, i32) {
    %c0_i32 = arith.constant 0 : i32
    %c0_i32_0 = arith.constant 0 : i32
    %c0_i32_1 = arith.constant 0 : i32
    return %c0_i32, %c0_i32_0 : i32, i32
  }
  func.func @transform_5(%arg0: i32) -> (i32, i32) {
    %c0_i32 = arith.constant 0 : i32
    %c0_i32_0 = arith.constant 0 : i32
    %c0_i32_1 = arith.constant 0 : i32
    return %c0_i32, %c0_i32_0 : i32, i32
  }
  func.func @transform_6(%arg0: i32) -> (i32, i32) {
    %c0_i32 = arith.constant 0 : i32
    %c0_i32_0 = arith.constant 0 : i32
    %c0_i32_1 = arith.constant 0 : i32
    return %c0_i32, %c0_i32_0 : i32, i32
  }
  func.func @transform_7(%arg0: i32) -> (i32, i32) {
    %c0_i32 = arith.constant 0 : i32
    %c0_i32_0 = arith.constant 0 : i32
    %c0_i32_1 = arith.constant 0 : i32
    return %c0_i32, %c0_i32_0 : i32, i32
  }
  func.func @transform_8(%arg0: i32) -> (i32, i32) {
    %c0_i32 = arith.constant 0 : i32
    %c0_i32_0 = arith.constant 0 : i32
    %c0_i32_1 = arith.constant 0 : i32
    return %c0_i32, %c0_i32_0 : i32, i32
  }
  func.func @transform_9(%arg0: i32) -> (i32, i32) {
    %c0_i32 = arith.constant 0 : i32
    %c0_i32_0 = arith.constant 0 : i32
    %c0_i32_1 = arith.constant 0 : i32
    return %c0_i32, %c0_i32_0 : i32, i32
  }
  func.func @transform_10(%arg0: i32) -> (i32, i32) {
    %c0_i32 = arith.constant 0 : i32
    %c0_i32_0 = arith.constant 0 : i32
    %c0_i32_1 = arith.constant 0 : i32
    return %c0_i32, %c0_i32_0 : i32, i32
  }
  func.func @transform_11(%arg0: i32) -> (i32, i32) {
    %c0_i32 = arith.constant 0 : i32
    %c0_i32_0 = arith.constant 0 : i32
    %c0_i32_1 = arith.constant 0 : i32
    return %c0_i32, %c0_i32_0 : i32, i32
  }
  func.func @transform_12(%arg0: i32) -> (i32, i32) {
    %c0_i32 = arith.constant 0 : i32
    %c0_i32_0 = arith.constant 0 : i32
    return %arg0, %c0_i32 : i32, i32
  }
}

</mosaic_0001>

<llo_original>
// kernel: encoder_layer_forward.3
$region0: #{encoder_layer_forward.3}
  #allocation0 [shape = 'u32[]', space=smem, size = 0x4, offset = 0x4, fixed_abs, tag = 'smem constant byte address 0x4 - core index']
  #allocation1 [shape = 'u32[144,128]{1,0:T(1,128)}', space=vmem, size = 0x12000, scoped, tag = 'internal scratch']
  %s0 = inlined_call_operand.vmem [shape: f32[16,128], index: 0, kind: input, shape index: {}]
  %s1 = inlined_call_operand.vmem [shape: bf16[128,384], index: 1, kind: input, shape index: {}]
  %s2 = inlined_call_operand.vmem [shape: f32[1,384], index: 2, kind: input, shape index: {}]
  %s3 = inlined_call_operand.vmem [shape: bf16[16,128], index: 3, kind: output, shape index: {0}]
  %s4 = inlined_call_operand.vmem [shape: bf16[16,128], index: 4, kind: output, shape index: {1}]
  %s5 = inlined_call_operand.vmem [shape: bf16[16,128], index: 5, kind: output, shape index: {2}]
  %6 = xla_tuple %s3, %s4, %s5
  %s7 = sld [smem:[#allocation0]]
  $region38: #{encoder_layer_forward.3} parent=0
    _
  %s9 = ssub.s32 1, %s7
  %s10 = scalar_select 0, %s9, %s7
  // Predicated region
  $region2: #{encoder_layer_forward.3} parent=0 // pred_check
    _
  $region3: #{encoder_layer_forward.3} parent=0 // pred_check_branch
    %12 = sbr.rel (0) target = $region5
  $region4: #{encoder_layer_forward.3} parent=0 // pred_region
    _
  $region5: #{encoder_layer_forward.3} parent=0 // pred_fallthru
    _
  // Predicated region
  $region6: #{encoder_layer_forward.3} parent=0 // pred_check
    _
  $region7: #{encoder_layer_forward.3} parent=0 // pred_check_branch
    %14 = sbr.rel (0) target = $region9
  $region8: #{encoder_layer_forward.3} parent=0 // pred_region
    _
  $region9: #{encoder_layer_forward.3} parent=0 // pred_fallthru
    _
  // Predicated region
  $region10: #{encoder_layer_forward.3} parent=0 // pred_check
    _
  $region11: #{encoder_layer_forward.3} parent=0 // pred_check_branch
    %16 = sbr.rel (0) target = $region13
  $region12: #{encoder_layer_forward.3} parent=0 // pred_region
    _
  $region13: #{encoder_layer_forward.3} parent=0 // pred_fallthru
    _
  %v18 = vld [vmem:[%s0] sm:$0xff]
  %v19 = vld [vmem:[%s0 + $0x8] sm:$0xff]
  %v20 = vpack.c.bf16 %v19, %v18
  %v21 = vld [vmem:[%s1] sm:$0xff]
  %v22 = vld [vmem:[%s1 + $0x8] sm:$0xf]
  %v23 = vld [vmem:[%s1 + $0xc] sm:$0xff]
  %v24 = vld [vmem:[%s1 + $0x14] sm:$0xf]
  %v25 = vld [vmem:[%s1 + $0x18] sm:$0xff]
  %v26 = vld [vmem:[%s1 + $0x20] sm:$0xf]
  %v27 = vld [vmem:[%s1 + $0x24] sm:$0xff]
  %v28 = vld [vmem:[%s1 + $0x2c] sm:$0xf]
  %v29 = vld [vmem:[%s1 + $0x30] sm:$0xff]
  %v30 = vld [vmem:[%s1 + $0x38] sm:$0xf]
  %v31 = vld [vmem:[%s1 + $0x3c] sm:$0xff]
  %v32 = vld [vmem:[%s1 + $0x44] sm:$0xf]
  %v33 = vld [vmem:[%s1 + $0x48] sm:$0xff]
  %v34 = vld [vmem:[%s1 + $0x50] sm:$0xf]
  %v35 = vld [vmem:[%s1 + $0x54] sm:$0xff]
  %v36 = vld [vmem:[%s1 + $0x5c] sm:$0xf]
  %v37 = vld [vmem:[%s1 + $0x60] sm:$0xff]
  %v38 = vld [vmem:[%s1 + $0x68] sm:$0xf]
  %v39 = vld [vmem:[%s1 + $0x6c] sm:$0xff]
  %v40 = vld [vmem:[%s1 + $0x74] sm:$0xf]
  %v41 = vld [vmem:[%s1 + $0x78] sm:$0xff]
  %v42 = vld [vmem:[%s1 + $0x80] sm:$0xf]
  %v43 = vld [vmem:[%s1 + $0x84] sm:$0xff]
  %v44 = vld [vmem:[%s1 + $0x8c] sm:$0xf]
  %v45 = vld [vmem:[%s1 + $0x90] sm:$0xff]
  %v46 = vld [vmem:[%s1 + $0x98] sm:$0xf]
  %v47 = vld [vmem:[%s1 + $0x9c] sm:$0xff]
  %v48 = vld [vmem:[%s1 + $0xa4] sm:$0xf]
  %v49 = vld [vmem:[%s1 + $0xa8] sm:$0xff]
  %v50 = vld [vmem:[%s1 + $0xb0] sm:$0xf]
  %v51 = vld [vmem:[%s1 + $0xb4] sm:$0xff]
  %v52 = vld [vmem:[%s1 + $0xbc] sm:$0xf]
  %v53 = vld [vmem:[%s2] sm:$0x7]
  %v55 = vlaneseq
  %v56 = vshrl.u32 %v55, 7
  %v57 = vsub.s32 0, %v56
  %v58 = vrot.slane %v53, %v57
  %v59 = vlaneseq
  %v60 = vshrl.u32 %v59, 7
  %v61 = vsub.s32 1, %v60
  %v62 = vrot.slane %v53, %v61
  %v63 = vlaneseq
  %v64 = vshrl.u32 %v63, 7
  %v65 = vsub.s32 2, %v64
  %v66 = vrot.slane %v53, %v65
  %v102 = vunpack.c.l.b16 %v21
  %v103 = vunpack.c.h.b16 %v21
  %v104 = vunpack.c.l.b16 %v22
  %v105 = vunpack.c.l.b16 %v23
  %v106 = vunpack.c.h.b16 %v23
  %v107 = vunpack.c.l.b16 %v24
  %v108 = vunpack.c.l.b16 %v25
  %v109 = vunpack.c.h.b16 %v25
  %v110 = vunpack.c.l.b16 %v26
  %v111 = vunpack.c.l.b16 %v27
  %v112 = vunpack.c.h.b16 %v27
  %v113 = vunpack.c.l.b16 %v28
  %v114 = vunpack.c.l.b16 %v29
  %v115 = vunpack.c.h.b16 %v29
  %v116 = vunpack.c.l.b16 %v30
  %v117 = vunpack.c.l.b16 %v31
  %v118 = vunpack.c.h.b16 %v31
  %v119 = vunpack.c.l.b16 %v32
  %v120 = vunpack.c.l.b16 %v33
  %v121 = vunpack.c.h.b16 %v33
  %v122 = vunpack.c.l.b16 %v34
  %v123 = vunpack.c.l.b16 %v35
  %v124 = vunpack.c.h.b16 %v35
  %v125 = vunpack.c.l.b16 %v36
  %v126 = vunpack.c.l.b16 %v37
  %v127 = vunpack.c.h.b16 %v37
  %v128 = vunpack.c.l.b16 %v38
  %v129 = vunpack.c.l.b16 %v39
  %v130 = vunpack.c.h.b16 %v39
  %v131 = vunpack.c.l.b16 %v40
  %v132 = vunpack.c.l.b16 %v41
  %v133 = vunpack.c.h.b16 %v41
  %v134 = vunpack.c.l.b16 %v42
  %v135 = vunpack.c.l.b16 %v43
  %v136 = vunpack.c.h.b16 %v43
  %v137 = vunpack.c.l.b16 %v44
  %v138 = vunpack.c.l.b16 %v45
  %v139 = vunpack.c.h.b16 %v45
  %v140 = vunpack.c.l.b16 %v46
  %v141 = vunpack.c.l.b16 %v47
  %v142 = vunpack.c.h.b16 %v47
  %v143 = vunpack.c.l.b16 %v48
  %v144 = vunpack.c.l.b16 %v49
  %v145 = vunpack.c.h.b16 %v49
  %v146 = vunpack.c.l.b16 %v50
  %v147 = vunpack.c.l.b16 %v51
  %v148 = vunpack.c.h.b16 %v51
  %v149 = vunpack.c.l.b16 %v52
  %v150 = vpack.c.b16 %v105, %v102
  %v151 = vpack.c.b16 %v106, %v103
  %v152 = vpack.c.b16 %v107, %v104
  %v153 = vpack.c.b16 %v111, %v108
  %v154 = vpack.c.b16 %v112, %v109
  %v155 = vpack.c.b16 %v113, %v110
  %v156 = vpack.c.b16 %v117, %v114
  %v157 = vpack.c.b16 %v118, %v115
  %v158 = vpack.c.b16 %v119, %v116
  %v159 = vpack.c.b16 %v123, %v120
  %v160 = vpack.c.b16 %v124, %v121
  %v161 = vpack.c.b16 %v125, %v122
  %v162 = vpack.c.b16 %v129, %v126
  %v163 = vpack.c.b16 %v130, %v127
  %v164 = vpack.c.b16 %v131, %v128
  %v165 = vpack.c.b16 %v135, %v132
  %v166 = vpack.c.b16 %v136, %v133
  %v167 = vpack.c.b16 %v137, %v134
  %v168 = vpack.c.b16 %v141, %v138
  %v169 = vpack.c.b16 %v142, %v139
  %v170 = vpack.c.b16 %v143, %v140
  %v171 = vpack.c.b16 %v147, %v144
  %v172 = vpack.c.b16 %v148, %v145
  %v173 = vpack.c.b16 %v149, %v146
  %198 = vmatprep.subr.bf16.mxu0 %v151
  %199 = vmatpush1.bf16.msra.mxu0 %v150
  %200 = vmatprep.subr.bf16.mxu0 %v154
  %201 = vmatpush1.bf16.msra.mxu0 %v153
  %202 = vmatprep.subr.bf16.mxu0 %v157
  %203 = vmatpush1.bf16.msra.mxu0 %v156
  %204 = vmatprep.subr.bf16.mxu0 %v160
  %205 = vmatpush1.bf16.msra.mxu0 %v159
  %206 = vmatprep.subr.bf16.mxu0 %v163
  %207 = vmatpush1.bf16.msra.mxu0 %v162
  %208 = vmatprep.subr.bf16.mxu0 %v166
  %209 = vmatpush1.bf16.msra.mxu0 %v165
  %210 = vmatprep.subr.bf16.mxu0 %v169
  %211 = vmatpush1.bf16.msra.mxu0 %v168
  %212 = vmatprep.subr.bf16.mxu0 %v172
  %213 = vmatpush1.bf16.msra.mxu0 %v171
  %214 = vmatprep.subr.bf16.mxu0 0
  %215 = vmatpush1.bf16.msra.mxu0 0
  %216 = vmatprep.subr.bf16.mxu0 0
  %217 = vmatpush1.bf16.msra.mxu0 0
  %218 = vmatprep.subr.bf16.mxu0 0
  %219 = vmatpush1.bf16.msra.mxu0 0
  %220 = vmatprep.subr.bf16.mxu0 0
  %221 = vmatpush1.bf16.msra.mxu0 0
  %222 = vmatprep.subr.bf16.mxu0 0
  %223 = vmatpush1.bf16.msra.mxu0 0
  %224 = vmatprep.subr.bf16.mxu0 0
  %225 = vmatpush1.bf16.msra.mxu0 0
  %226 = vmatprep.subr.bf16.mxu0 0
  %227 = vmatpush1.bf16.msra.mxu0 0
  %228 = vmatprep.subr.bf16.mxu0 0
  %229 = vmatpush1.bf16.msra.mxu0 0
  %230 = vmatprep.mubr.bf16.mxu0 0
  %231 = vmatmul.mubr.bf16.gmra.mrb[0].mxu0 %v20
  %v232 = vpop.f32.mrb[0].mxu0
  %v233 = vadd.f32 %v58, %v232
  %v234 = vpop.f32.mrb[0].mxu0
  %v235 = vadd.f32 %v62, %v234
  %v236 = vpop.f32.mrb[0].mxu0
  %v237 = vadd.f32 %v58, %v236
  %v238 = vpop.f32.mrb[0].mxu0
  %v239 = vadd.f32 %v62, %v238
  %240 = vdwg.mxu0
  %241 = vmatprep.subr.bf16.mxu0 0
  %242 = vmatpush1.bf16.msra.mxu0 %v152
  %243 = vmatprep.subr.bf16.mxu0 0
  %244 = vmatpush1.bf16.msra.mxu0 %v155
  %245 = vmatprep.subr.bf16.mxu0 0
  %246 = vmatpush1.bf16.msra.mxu0 %v158
  %247 = vmatprep.subr.bf16.mxu0 0
  %248 = vmatpush1.bf16.msra.mxu0 %v161
  %249 = vmatprep.subr.bf16.mxu0 0
  %250 = vmatpush1.bf16.msra.mxu0 %v164
  %251 = vmatprep.subr.bf16.mxu0 0
  %252 = vmatpush1.bf16.msra.mxu0 %v167
  %253 = vmatprep.subr.bf16.mxu0 0
  %254 = vmatpush1.bf16.msra.mxu0 %v170
  %255 = vmatprep.subr.bf16.mxu0 0
  %256 = vmatpush1.bf16.msra.mxu0 %v173
  %257 = vmatprep.subr.bf16.mxu0 0
  %258 = vmatpush1.bf16.msra.mxu0 0
  %259 = vmatprep.subr.bf16.mxu0 0
  %260 = vmatpush1.bf16.msra.mxu0 0
  %261 = vmatprep.subr.bf16.mxu0 0
  %262 = vmatpush1.bf16.msra.mxu0 0
  %263 = vmatprep.subr.bf16.mxu0 0
  %264 = vmatpush1.bf16.msra.mxu0 0
  %265 = vmatprep.subr.bf16.mxu0 0
  %266 = vmatpush1.bf16.msra.mxu0 0
  %267 = vmatprep.subr.bf16.mxu0 0
  %268 = vmatpush1.bf16.msra.mxu0 0
  %269 = vmatprep.subr.bf16.mxu0 0
  %270 = vmatpush1.bf16.msra.mxu0 0
  %271 = vmatprep.subr.bf16.mxu0 0
  %272 = vmatpush1.bf16.msra.mxu0 0
  %273 = vmatprep.mubr.bf16.mxu0 0
  %274 = vmatmul.mubr.bf16.gmra.mrb[0].mxu0 %v20
  %v275 = vpop.f32.mrb[0].mxu0
  %v276 = vadd.f32 %v66, %v275
  %v277 = vpop.f32.mrb[0].mxu0
  %v278 = vpop.f32.mrb[0].mxu0
  %v279 = vadd.f32 %v66, %v278
  %v280 = vpop.f32.mrb[0].mxu0
  %281 = vdwg.mxu0
  %v282 = vpack.c.bf16 %v237, %v233
  %v283 = vpack.c.bf16 %v239, %v235
  %v284 = vpack.c.bf16 %v279, %v276
  %v286 = vunpack.c.l.b16 %v282
  %v287 = vunpack.c.h.b16 %v282
  %v288 = vpack.c.b16 %v286, %v286
  %v289 = vpack.c.b16 %v287, %v287
  %292 = vst [vmem:[%s3] sm:$0xf] %v288
  %293 = vst [vmem:[%s3 + $0x4] sm:$0xf] %v289
  %v295 = vunpack.c.l.b16 %v283
  %v296 = vunpack.c.h.b16 %v283
  %v297 = vpack.c.b16 %v295, %v295
  %v298 = vpack.c.b16 %v296, %v296
  %301 = vst [vmem:[%s4] sm:$0xf] %v297
  %302 = vst [vmem:[%s4 + $0x4] sm:$0xf] %v298
  %v304 = vunpack.c.l.b16 %v284
  %v305 = vunpack.c.h.b16 %v284
  %v306 = vpack.c.b16 %v304, %v304
  %v307 = vpack.c.b16 %v305, %v305
  %310 = vst [vmem:[%s5] sm:$0xf] %v306
  %311 = vst [vmem:[%s5 + $0x4] sm:$0xf] %v307
  // Predicated region
  $region14: #{encoder_layer_forward.3} parent=0 // pred_check
    _
  $region15: #{encoder_layer_forward.3} parent=0 // pred_check_branch
    %313 = sbr.rel (0) target = $region17
  $region16: #{encoder_layer_forward.3} parent=0 // pred_region
    _
  $region17: #{encoder_layer_forward.3} parent=0 // pred_fallthru
    _
  // Predicated region
  $region18: #{encoder_layer_forward.3} parent=0 // pred_check
    _
  $region19: #{encoder_layer_forward.3} parent=0 // pred_check_branch
    %315 = sbr.rel (0) target = $region21
  $region20: #{encoder_layer_forward.3} parent=0 // pred_region
    _
  $region21: #{encoder_layer_forward.3} parent=0 // pred_fallthru
    _
  // Predicated region
  $region22: #{encoder_layer_forward.3} parent=0 // pred_check
    _
  $region23: #{encoder_layer_forward.3} parent=0 // pred_check_branch
    %317 = sbr.rel (0) target = $region25
  $region24: #{encoder_layer_forward.3} parent=0 // pred_region
    _
  $region25: #{encoder_layer_forward.3} parent=0 // pred_fallthru
    _
  // Predicated region
  $region26: #{encoder_layer_forward.3} parent=0 // pred_check
    _
  $region27: #{encoder_layer_forward.3} parent=0 // pred_check_branch
    %319 = sbr.rel (0) target = $region29
  $region28: #{encoder_layer_forward.3} parent=0 // pred_region
    _
  $region29: #{encoder_layer_forward.3} parent=0 // pred_fallthru
    _
  // Predicated region
  $region30: #{encoder_layer_forward.3} parent=0 // pred_check
    _
  $region31: #{encoder_layer_forward.3} parent=0 // pred_check_branch
    %321 = sbr.rel (0) target = $region33
  $region32: #{encoder_layer_forward.3} parent=0 // pred_region
    _
  $region33: #{encoder_layer_forward.3} parent=0 // pred_fallthru
    _
  // Predicated region
  $region34: #{encoder_layer_forward.3} parent=0 // pred_check
    _
  $region35: #{encoder_layer_forward.3} parent=0 // pred_check_branch
    %323 = sbr.rel (0) target = $region37
  $region36: #{encoder_layer_forward.3} parent=0 // pred_region
    _
  $region37: #{encoder_layer_forward.3} parent=0 // pred_fallthru
    _

// kernel: encoder_layer_forward.5
$region0: #{encoder_layer_forward.5}
  #allocation0 [shape = 'u32[]', space=smem, size = 0x4, offset = 0x4, fixed_abs, tag = 'smem constant byte address 0x4 - core index']
  #allocation1 [shape = 'u32[144,128]{1,0:T(1,128)}', space=vmem, size = 0x12000, scoped, tag = 'internal scratch']
  %s0 = inlined_call_operand.vmem [shape: bf16[16,128], index: 0, kind: input, shape index: {}]
  %s1 = inlined_call_operand.vmem [shape: f32[16,128], index: 1, kind: input, shape index: {}]
  %s2 = inlined_call_operand.vmem [shape: bf16[128,128], index: 2, kind: input, shape index: {}]
  %s3 = inlined_call_operand.vmem [shape: f32[1,128], index: 3, kind: input, shape index: {}]
  %s4 = inlined_call_operand.vmem [shape: f32[1,128], index: 4, kind: input, shape index: {}]
  %s5 = inlined_call_operand.vmem [shape: f32[1,128], index: 5, kind: input, shape index: {}]
  %s6 = inlined_call_operand.vmem [shape: bf16[128,256], index: 6, kind: input, shape index: {}]
  %s7 = inlined_call_operand.vmem [shape: f32[1,256], index: 7, kind: input, shape index: {}]
  %s8 = inlined_call_operand.vmem [shape: bf16[256,128], index: 8, kind: input, shape index: {}]
  %s9 = inlined_call_operand.vmem [shape: f32[1,128], index: 9, kind: input, shape index: {}]
  %s10 = inlined_call_operand.vmem [shape: f32[1,128], index: 10, kind: input, shape index: {}]
  %s11 = inlined_call_operand.vmem [shape: f32[1,128], index: 11, kind: input, shape index: {}]
  %s12 = inlined_call_operand.hbm [shape: f32[16,128], index: 12, kind: output, shape index: {}]
  %s13 = sld [smem:[#allocation0]]
  $region58: #{encoder_layer_forward.5} parent=0
    _
  %s15 = ssub.s32 1, %s13
  %s16 = scalar_select 0, %s15, %s13
  $region1: #{encoder_layer_forward.5} parent=0
    #allocation2 [shape = 'u8[8192]{0}', space=vmem, size = 0x2000, scoped, tag = 'output window, operand 0, single buffered']
    #allocation3 [shape = 's32[1]{0}', space=sflag, size = 0x4, scoped, tag = 'scoped memory for encoder_layer_forward.5']
    %17 = vsyncpa [#allocation3], 0
    // Predicated region
    $region2: #{encoder_layer_forward.5} parent=1 // pred_check
      _
    $region3: #{encoder_layer_forward.5} parent=1 // pred_check_branch
      %19 = sbr.rel (0) target = $region5
    $region4: #{encoder_layer_forward.5} parent=1 // pred_region
      _
    $region5: #{encoder_layer_forward.5} parent=1 // pred_fallthru
      _
    // Predicated region
    $region6: #{encoder_layer_forward.5} parent=1 // pred_check
      _
    $region7: #{encoder_layer_forward.5} parent=1 // pred_check_branch
      %21 = sbr.rel (0) target = $region9
    $region8: #{encoder_layer_forward.5} parent=1 // pred_region
      _
    $region9: #{encoder_layer_forward.5} parent=1 // pred_fallthru
      _
    // Predicated region
    $region10: #{encoder_layer_forward.5} parent=1 // pred_check
      _
    $region11: #{encoder_layer_forward.5} parent=1 // pred_check_branch
      %23 = sbr.rel (0) target = $region13
    $region12: #{encoder_layer_forward.5} parent=1 // pred_region
      _
    $region13: #{encoder_layer_forward.5} parent=1 // pred_fallthru
      _
    // Predicated region
    $region14: #{encoder_layer_forward.5} parent=1 // pred_check
      _
    $region15: #{encoder_layer_forward.5} parent=1 // pred_check_branch
      %25 = sbr.rel (0) target = $region17
    $region16: #{encoder_layer_forward.5} parent=1 // pred_region
      _
    $region17: #{encoder_layer_forward.5} parent=1 // pred_fallthru
      _
    // Predicated region
    $region18: #{encoder_layer_forward.5} parent=1 // pred_check
      _
    $region19: #{encoder_layer_forward.5} parent=1 // pred_check_branch
      %27 = sbr.rel (0) target = $region21
    $region20: #{encoder_layer_forward.5} parent=1 // pred_region
      _
    $region21: #{encoder_layer_forward.5} parent=1 // pred_fallthru
      _
    // Predicated region
    $region22: #{encoder_layer_forward.5} parent=1 // pred_check
      _
    $region23: #{encoder_layer_forward.5} parent=1 // pred_check_branch
      %29 = sbr.rel (0) target = $region25
    $region24: #{encoder_layer_forward.5} parent=1 // pred_region
      _
    $region25: #{encoder_layer_forward.5} parent=1 // pred_fallthru
      _
    // Predicated region
    $region26: #{encoder_layer_forward.5} parent=1 // pred_check
      _
    $region27: #{encoder_layer_forward.5} parent=1 // pred_check_branch
      %31 = sbr.rel (0) target = $region29
    $region28: #{encoder_layer_forward.5} parent=1 // pred_region
      _
    $region29: #{encoder_layer_forward.5} parent=1 // pred_fallthru
      _
    // Predicated region
    $region30: #{encoder_layer_forward.5} parent=1 // pred_check
      _
    $region31: #{encoder_layer_forward.5} parent=1 // pred_check_branch
      %33 = sbr.rel (0) target = $region33
    $region32: #{encoder_layer_forward.5} parent=1 // pred_region
      _
    $region33: #{encoder_layer_forward.5} parent=1 // pred_fallthru
      _
    // Predicated region
    $region34: #{encoder_layer_forward.5} parent=1 // pred_check
      _
    $region35: #{encoder_layer_forward.5} parent=1 // pred_check_branch
      %35 = sbr.rel (0) target = $region37
    $region36: #{encoder_layer_forward.5} parent=1 // pred_region
      _
    $region37: #{encoder_layer_forward.5} parent=1 // pred_fallthru
      _
    // Predicated region
    $region38: #{encoder_layer_forward.5} parent=1 // pred_check
      _
    $region39: #{encoder_layer_forward.5} parent=1 // pred_check_branch
      %37 = sbr.rel (0) target = $region41
    $region40: #{encoder_layer_forward.5} parent=1 // pred_region
      _
    $region41: #{encoder_layer_forward.5} parent=1 // pred_fallthru
      _
    // Predicated region
    $region42: #{encoder_layer_forward.5} parent=1 // pred_check
      _
    $region43: #{encoder_layer_forward.5} parent=1 // pred_check_branch
      %39 = sbr.rel (0) target = $region45
    $region44: #{encoder_layer_forward.5} parent=1 // pred_region
      _
    $region45: #{encoder_layer_forward.5} parent=1 // pred_fallthru
      _
    // Predicated region
    $region46: #{encoder_layer_forward.5} parent=1 // pred_check
      _
    $region47: #{encoder_layer_forward.5} parent=1 // pred_check_branch
      %41 = sbr.rel (0) target = $region49
    $region48: #{encoder_layer_forward.5} parent=1 // pred_region
      _
    $region49: #{encoder_layer_forward.5} parent=1 // pred_fallthru
      _
    %v43 = vld [vmem:[%s0] sm:$0xf]
    %v44 = vld [vmem:[%s0 + $0x4] sm:$0xf]
    %v45 = vld [vmem:[%s2] sm:$0xf]
    %v46 = vld [vmem:[%s2 + $0x4] sm:$0xf]
    %v47 = vld [vmem:[%s2 + $0x8] sm:$0xf]
    %v48 = vld [vmem:[%s2 + $0xc] sm:$0xf]
    %v49 = vld [vmem:[%s2 + $0x10] sm:$0xf]
    %v50 = vld [vmem:[%s2 + $0x14] sm:$0xf]
    %v51 = vld [vmem:[%s2 + $0x18] sm:$0xf]
    %v52 = vld [vmem:[%s2 + $0x1c] sm:$0xf]
    %v53 = vld [vmem:[%s2 + $0x20] sm:$0xf]
    %v54 = vld [vmem:[%s2 + $0x24] sm:$0xf]
    %v55 = vld [vmem:[%s2 + $0x28] sm:$0xf]
    %v56 = vld [vmem:[%s2 + $0x2c] sm:$0xf]
    %v57 = vld [vmem:[%s2 + $0x30] sm:$0xf]
    %v58 = vld [vmem:[%s2 + $0x34] sm:$0xf]
    %v59 = vld [vmem:[%s2 + $0x38] sm:$0xf]
    %v60 = vld [vmem:[%s2 + $0x3c] sm:$0xf]
    %v63 = vunpack.c.l.b16 %v43
    %v64 = vunpack.c.l.b16 %v44
    %v65 = vpack.c.b16 %v64, %v63
    %v83 = vunpack.c.l.b16 %v45
    %v84 = vunpack.c.l.b16 %v46
    %v85 = vunpack.c.l.b16 %v47
    %v86 = vunpack.c.l.b16 %v48
    %v87 = vunpack.c.l.b16 %v49
    %v88 = vunpack.c.l.b16 %v50
    %v89 = vunpack.c.l.b16 %v51
    %v90 = vunpack.c.l.b16 %v52
    %v91 = vunpack.c.l.b16 %v53
    %v92 = vunpack.c.l.b16 %v54
    %v93 = vunpack.c.l.b16 %v55
    %v94 = vunpack.c.l.b16 %v56
    %v95 = vunpack.c.l.b16 %v57
    %v96 = vunpack.c.l.b16 %v58
    %v97 = vunpack.c.l.b16 %v59
    %v98 = vunpack.c.l.b16 %v60
    %v99 = vpack.c.b16 %v84, %v83
    %v100 = vpack.c.b16 %v86, %v85
    %v101 = vpack.c.b16 %v88, %v87
    %v102 = vpack.c.b16 %v90, %v89
    %v103 = vpack.c.b16 %v92, %v91
    %v104 = vpack.c.b16 %v94, %v93
    %v105 = vpack.c.b16 %v96, %v95
    %v106 = vpack.c.b16 %v98, %v97
    %115 = vmatprep.subr.bf16.mxu0 0
    %116 = vmatpush1.bf16.msra.mxu0 %v99
    %117 = vmatprep.subr.bf16.mxu0 0
    %118 = vmatpush1.bf16.msra.mxu0 %v100
    %119 = vmatprep.subr.bf16.mxu0 0
    %120 = vmatpush1.bf16.msra.mxu0 %v101
    %121 = vmatprep.subr.bf16.mxu0 0
    %122 = vmatpush1.bf16.msra.mxu0 %v102
    %123 = vmatprep.subr.bf16.mxu0 0
    %124 = vmatpush1.bf16.msra.mxu0 %v103
    %125 = vmatprep.subr.bf16.mxu0 0
    %126 = vmatpush1.bf16.msra.mxu0 %v104
    %127 = vmatprep.subr.bf16.mxu0 0
    %128 = vmatpush1.bf16.msra.mxu0 %v105
    %129 = vmatprep.subr.bf16.mxu0 0
    %130 = vmatpush1.bf16.msra.mxu0 %v106
    %131 = vmatprep.subr.bf16.mxu0 0
    %132 = vmatpush1.bf16.msra.mxu0 0
    %133 = vmatprep.subr.bf16.mxu0 0
    %134 = vmatpush1.bf16.msra.mxu0 0
    %135 = vmatprep.subr.bf16.mxu0 0
    %136 = vmatpush1.bf16.msra.mxu0 0
    %137 = vmatprep.subr.bf16.mxu0 0
    %138 = vmatpush1.bf16.msra.mxu0 0
    %139 = vmatprep.subr.bf16.mxu0 0
    %140 = vmatpush1.bf16.msra.mxu0 0
    %141 = vmatprep.subr.bf16.mxu0 0
    %142 = vmatpush1.bf16.msra.mxu0 0
    %143 = vmatprep.subr.bf16.mxu0 0
    %144 = vmatpush1.bf16.msra.mxu0 0
    %145 = vmatprep.subr.bf16.mxu0 0
    %146 = vmatpush1.bf16.msra.mxu0 0
    %147 = vmatprep.mubr.bf16.mxu0 0
    %148 = vmatmul.mubr.bf16.gmra.mrb[0].mxu0 %v65
    %v149 = vpop.f32.mrb[0].mxu0
    %v150 = vadd.f32 0.0, %v149
    %v151 = vpop.f32.mrb[0].mxu0
    %v152 = vpop.f32.mrb[0].mxu0
    %v153 = vadd.f32 0.0, %v152
    %v154 = vpop.f32.mrb[0].mxu0
    %155 = vdwg.mxu0
    %v156 = vld [vmem:[%s1] sm:$0xff]
    %v157 = vld [vmem:[%s1 + $0x8] sm:$0xff]
    %v158 = vadd.f32 %v156, %v150
    %v159 = vadd.f32 %v157, %v153
    %v160 = vld [vmem:[%s3] sm:$0x1]
    %v162 = vlaneseq
    %v163 = vshrl.u32 %v162, 7
    %v164 = vsub.s32 0, %v163
    %v165 = vrot.slane %v160, %v164
    %v167 = vadd.f32 %v158, %v165
    %v168 = vadd.f32 %v159, %v165
    %v169 = vld [vmem:[%s4] sm:$0x1]
    %v170 = vld [vmem:[%s5] sm:$0x1]
    %171 = vadd.xlane.f32.xlu0 %v167
    %v172 = vpop.xlane.xlu0 %171
    %173 = vadd.xlane.f32.xlu0 %v168
    %v174 = vpop.xlane.xlu0 %173
    %v175 = vrcp.pop 128.0
    %v176 = vmul.f32 %v172, %v175
    %v177 = vmul.f32 %v174, %v175
    %v178 = vsub.f32 %v167, %v176
    %v179 = vsub.f32 %v168, %v177
    %v180 = vmul.f32 %v178, %v178
    %v181 = vmul.f32 %v179, %v179
    %182 = vadd.xlane.f32.xlu0 %v180
    %v183 = vpop.xlane.xlu0 %182
    %184 = vadd.xlane.f32.xlu0 %v181
    %v185 = vpop.xlane.xlu0 %184
    %v186 = vmul.f32 %v183, %v175
    %v187 = vmul.f32 %v185, %v175
    %v188 = vadd.f32 %v186, 1e-05
    %v189 = vadd.f32 %v187, 1e-05
    %v190 = vrsqrt.pop %v188
    %v191 = vrsqrt.pop %v189
    %v192 = vmul.f32 %v178, %v190
    %v193 = vmul.f32 %v179, %v191
    %v195 = vlaneseq
    %v196 = vshrl.u32 %v195, 7
    %v197 = vsub.s32 0, %v196
    %v198 = vrot.slane %v169, %v197
    %v200 = vmul.f32 %v192, %v198
    %v201 = vmul.f32 %v193, %v198
    %v203 = vlaneseq
    %v204 = vshrl.u32 %v203, 7
    %v205 = vsub.s32 0, %v204
    %v206 = vrot.slane %v170, %v205
    %v208 = vadd.f32 %v200, %v206
    %v209 = vadd.f32 %v201, %v206
    %v210 = vpack.c.bf16 %v209, %v208
    %v211 = vld [vmem:[%s6] sm:$0xff]
    %v212 = vld [vmem:[%s6 + $0x8] sm:$0xff]
    %v213 = vld [vmem:[%s6 + $0x10] sm:$0xff]
    %v214 = vld [vmem:[%s6 + $0x18] sm:$0xff]
    %v215 = vld [vmem:[%s6 + $0x20] sm:$0xff]
    %v216 = vld [vmem:[%s6 + $0x28] sm:$0xff]
    %v217 = vld [vmem:[%s6 + $0x30] sm:$0xff]
    %v218 = vld [vmem:[%s6 + $0x38] sm:$0xff]
    %v219 = vld [vmem:[%s6 + $0x40] sm:$0xff]
    %v220 = vld [vmem:[%s6 + $0x48] sm:$0xff]
    %v221 = vld [vmem:[%s6 + $0x50] sm:$0xff]
    %v222 = vld [vmem:[%s6 + $0x58] sm:$0xff]
    %v223 = vld [vmem:[%s6 + $0x60] sm:$0xff]
    %v224 = vld [vmem:[%s6 + $0x68] sm:$0xff]
    %v225 = vld [vmem:[%s6 + $0x70] sm:$0xff]
    %v226 = vld [vmem:[%s6 + $0x78] sm:$0xff]
    %v227 = vld [vmem:[%s7] sm:$0x3]
    %v229 = vlaneseq
    %v230 = vshrl.u32 %v229, 7
    %v231 = vsub.s32 0, %v230
    %v232 = vrot.slane %v227, %v231
    %v233 = vlaneseq
    %v234 = vshrl.u32 %v233, 7
    %v235 = vsub.s32 1, %v234
    %v236 = vrot.slane %v227, %v235
    %v255 = vunpack.c.l.b16 %v211
    %v256 = vunpack.c.h.b16 %v211
    %v257 = vunpack.c.l.b16 %v212
    %v258 = vunpack.c.h.b16 %v212
    %v259 = vunpack.c.l.b16 %v213
    %v260 = vunpack.c.h.b16 %v213
    %v261 = vunpack.c.l.b16 %v214
    %v262 = vunpack.c.h.b16 %v214
    %v263 = vunpack.c.l.b16 %v215
    %v264 = vunpack.c.h.b16 %v215
    %v265 = vunpack.c.l.b16 %v216
    %v266 = vunpack.c.h.b16 %v216
    %v267 = vunpack.c.l.b16 %v217
    %v268 = vunpack.c.h.b16 %v217
    %v269 = vunpack.c.l.b16 %v218
    %v270 = vunpack.c.h.b16 %v218
    %v271 = vunpack.c.l.b16 %v219
    %v272 = vunpack.c.h.b16 %v219
    %v273 = vunpack.c.l.b16 %v220
    %v274 = vunpack.c.h.b16 %v220
    %v275 = vunpack.c.l.b16 %v221
    %v276 = vunpack.c.h.b16 %v221
    %v277 = vunpack.c.l.b16 %v222
    %v278 = vunpack.c.h.b16 %v222
    %v279 = vunpack.c.l.b16 %v223
    %v280 = vunpack.c.h.b16 %v223
    %v281 = vunpack.c.l.b16 %v224
    %v282 = vunpack.c.h.b16 %v224
    %v283 = vunpack.c.l.b16 %v225
    %v284 = vunpack.c.h.b16 %v225
    %v285 = vunpack.c.l.b16 %v226
    %v286 = vunpack.c.h.b16 %v226
    %v287 = vpack.c.b16 %v257, %v255
    %v288 = vpack.c.b16 %v258, %v256
    %v289 = vpack.c.b16 %v261, %v259
    %v290 = vpack.c.b16 %v262, %v260
    %v291 = vpack.c.b16 %v265, %v263
    %v292 = vpack.c.b16 %v266, %v264
    %v293 = vpack.c.b16 %v269, %v267
    %v294 = vpack.c.b16 %v270, %v268
    %v295 = vpack.c.b16 %v273, %v271
    %v296 = vpack.c.b16 %v274, %v272
    %v297 = vpack.c.b16 %v277, %v275
    %v298 = vpack.c.b16 %v278, %v276
    %v299 = vpack.c.b16 %v281, %v279
    %v300 = vpack.c.b16 %v282, %v280
    %v301 = vpack.c.b16 %v285, %v283
    %v302 = vpack.c.b16 %v286, %v284
    %319 = vmatprep.subr.bf16.mxu0 %v288
    %320 = vmatpush1.bf16.msra.mxu0 %v287
    %321 = vmatprep.subr.bf16.mxu0 %v290
    %322 = vmatpush1.bf16.msra.mxu0 %v289
    %323 = vmatprep.subr.bf16.mxu0 %v292
    %324 = vmatpush1.bf16.msra.mxu0 %v291
    %325 = vmatprep.subr.bf16.mxu0 %v294
    %326 = vmatpush1.bf16.msra.mxu0 %v293
    %327 = vmatprep.subr.bf16.mxu0 %v296
    %328 = vmatpush1.bf16.msra.mxu0 %v295
    %329 = vmatprep.subr.bf16.mxu0 %v298
    %330 = vmatpush1.bf16.msra.mxu0 %v297
    %331 = vmatprep.subr.bf16.mxu0 %v300
    %332 = vmatpush1.bf16.msra.mxu0 %v299
    %333 = vmatprep.subr.bf16.mxu0 %v302
    %334 = vmatpush1.bf16.msra.mxu0 %v301
    %335 = vmatprep.subr.bf16.mxu0 0
    %336 = vmatpush1.bf16.msra.mxu0 0
    %337 = vmatprep.subr.bf16.mxu0 0
    %338 = vmatpush1.bf16.msra.mxu0 0
    %339 = vmatprep.subr.bf16.mxu0 0
    %340 = vmatpush1.bf16.msra.mxu0 0
    %341 = vmatprep.subr.bf16.mxu0 0
    %342 = vmatpush1.bf16.msra.mxu0 0
    %343 = vmatprep.subr.bf16.mxu0 0
    %344 = vmatpush1.bf16.msra.mxu0 0
    %345 = vmatprep.subr.bf16.mxu0 0
    %346 = vmatpush1.bf16.msra.mxu0 0
    %347 = vmatprep.subr.bf16.mxu0 0
    %348 = vmatpush1.bf16.msra.mxu0 0
    %349 = vmatprep.subr.bf16.mxu0 0
    %350 = vmatpush1.bf16.msra.mxu0 0
    %351 = vmatprep.mubr.bf16.mxu0 0
    %352 = vmatmul.mubr.bf16.gmra.mrb[0].mxu0 %v210
    %v353 = vpop.f32.mrb[0].mxu0
    %v354 = vadd.f32 %v232, %v353
    %v355 = vpop.f32.mrb[0].mxu0
    %v356 = vadd.f32 %v236, %v355
    %v357 = vpop.f32.mrb[0].mxu0
    %v358 = vadd.f32 %v232, %v357
    %v359 = vpop.f32.mrb[0].mxu0
    %v360 = vadd.f32 %v236, %v359
    %361 = vdwg.mxu0
    %v362 = vmax.f32 %v354, 0.0
    %v363 = vmax.f32 %v356, 0.0
    %v364 = vmax.f32 %v358, 0.0
    %v365 = vmax.f32 %v360, 0.0
    %v366 = vpack.c.bf16 %v364, %v362
    %v367 = vpack.c.bf16 %v365, %v363
    %v368 = vld [vmem:[%s8] sm:$0xf]
    %v369 = vld [vmem:[%s8 + $0x4] sm:$0xf]
    %v370 = vld [vmem:[%s8 + $0x8] sm:$0xf]
    %v371 = vld [vmem:[%s8 + $0xc] sm:$0xf]
    %v372 = vld [vmem:[%s8 + $0x10] sm:$0xf]
    %v373 = vld [vmem:[%s8 + $0x14] sm:$0xf]
    %v374 = vld [vmem:[%s8 + $0x18] sm:$0xf]
    %v375 = vld [vmem:[%s8 + $0x1c] sm:$0xf]
    %v376 = vld [vmem:[%s8 + $0x20] sm:$0xf]
    %v377 = vld [vmem:[%s8 + $0x24] sm:$0xf]
    %v378 = vld [vmem:[%s8 + $0x28] sm:$0xf]
    %v379 = vld [vmem:[%s8 + $0x2c] sm:$0xf]
    %v380 = vld [vmem:[%s8 + $0x30] sm:$0xf]
    %v381 = vld [vmem:[%s8 + $0x34] sm:$0xf]
    %v382 = vld [vmem:[%s8 + $0x38] sm:$0xf]
    %v383 = vld [vmem:[%s8 + $0x3c] sm:$0xf]
    %v384 = vld [vmem:[%s8 + $0x40] sm:$0xf]
    %v385 = vld [vmem:[%s8 + $0x44] sm:$0xf]
    %v386 = vld [vmem:[%s8 + $0x48] sm:$0xf]
    %v387 = vld [vmem:[%s8 + $0x4c] sm:$0xf]
    %v388 = vld [vmem:[%s8 + $0x50] sm:$0xf]
    %v389 = vld [vmem:[%s8 + $0x54] sm:$0xf]
    %v390 = vld [vmem:[%s8 + $0x58] sm:$0xf]
    %v391 = vld [vmem:[%s8 + $0x5c] sm:$0xf]
    %v392 = vld [vmem:[%s8 + $0x60] sm:$0xf]
    %v393 = vld [vmem:[%s8 + $0x64] sm:$0xf]
    %v394 = vld [vmem:[%s8 + $0x68] sm:$0xf]
    %v395 = vld [vmem:[%s8 + $0x6c] sm:$0xf]
    %v396 = vld [vmem:[%s8 + $0x70] sm:$0xf]
    %v397 = vld [vmem:[%s8 + $0x74] sm:$0xf]
    %v398 = vld [vmem:[%s8 + $0x78] sm:$0xf]
    %v399 = vld [vmem:[%s8 + $0x7c] sm:$0xf]
    %v400 = vld [vmem:[%s9] sm:$0x1]
    %v402 = vlaneseq
    %v403 = vshrl.u32 %v402, 7
    %v404 = vsub.s32 0, %v403
    %v405 = vrot.slane %v400, %v404
    %v439 = vunpack.c.l.b16 %v368
    %v440 = vunpack.c.l.b16 %v369
    %v441 = vunpack.c.l.b16 %v370
    %v442 = vunpack.c.l.b16 %v371
    %v443 = vunpack.c.l.b16 %v372
    %v444 = vunpack.c.l.b16 %v373
    %v445 = vunpack.c.l.b16 %v374
    %v446 = vunpack.c.l.b16 %v375
    %v447 = vunpack.c.l.b16 %v376
    %v448 = vunpack.c.l.b16 %v377
    %v449 = vunpack.c.l.b16 %v378
    %v450 = vunpack.c.l.b16 %v379
    %v451 = vunpack.c.l.b16 %v380
    %v452 = vunpack.c.l.b16 %v381
    %v453 = vunpack.c.l.b16 %v382
    %v454 = vunpack.c.l.b16 %v383
    %v455 = vunpack.c.l.b16 %v384
    %v456 = vunpack.c.l.b16 %v385
    %v457 = vunpack.c.l.b16 %v386
    %v458 = vunpack.c.l.b16 %v387
    %v459 = vunpack.c.l.b16 %v388
    %v460 = vunpack.c.l.b16 %v389
    %v461 = vunpack.c.l.b16 %v390
    %v462 = vunpack.c.l.b16 %v391
    %v463 = vunpack.c.l.b16 %v392
    %v464 = vunpack.c.l.b16 %v393
    %v465 = vunpack.c.l.b16 %v394
    %v466 = vunpack.c.l.b16 %v395
    %v467 = vunpack.c.l.b16 %v396
    %v468 = vunpack.c.l.b16 %v397
    %v469 = vunpack.c.l.b16 %v398
    %v470 = vunpack.c.l.b16 %v399
    %v471 = vpack.c.b16 %v440, %v439
    %v472 = vpack.c.b16 %v442, %v441
    %v473 = vpack.c.b16 %v444, %v443
    %v474 = vpack.c.b16 %v446, %v445
    %v475 = vpack.c.b16 %v448, %v447
    %v476 = vpack.c.b16 %v450, %v449
    %v477 = vpack.c.b16 %v452, %v451
    %v478 = vpack.c.b16 %v454, %v453
    %v479 = vpack.c.b16 %v456, %v455
    %v480 = vpack.c.b16 %v458, %v457
    %v481 = vpack.c.b16 %v460, %v459
    %v482 = vpack.c.b16 %v462, %v461
    %v483 = vpack.c.b16 %v464, %v463
    %v484 = vpack.c.b16 %v466, %v465
    %v485 = vpack.c.b16 %v468, %v467
    %v486 = vpack.c.b16 %v470, %v469
    %503 = vmatprep.subr.bf16.mxu0 0
    %504 = vmatpush1.bf16.msra.mxu0 %v471
    %505 = vmatprep.subr.bf16.mxu0 0
    %506 = vmatpush1.bf16.msra.mxu0 %v472
    %507 = vmatprep.subr.bf16.mxu0 0
    %508 = vmatpush1.bf16.msra.mxu0 %v473
    %509 = vmatprep.subr.bf16.mxu0 0
    %510 = vmatpush1.bf16.msra.mxu0 %v474
    %511 = vmatprep.subr.bf16.mxu0 0
    %512 = vmatpush1.bf16.msra.mxu0 %v475
    %513 = vmatprep.subr.bf16.mxu0 0
    %514 = vmatpush1.bf16.msra.mxu0 %v476
    %515 = vmatprep.subr.bf16.mxu0 0
    %516 = vmatpush1.bf16.msra.mxu0 %v477
    %517 = vmatprep.subr.bf16.mxu0 0
    %518 = vmatpush1.bf16.msra.mxu0 %v478
    %519 = vmatprep.subr.bf16.mxu0 0
    %520 = vmatpush1.bf16.msra.mxu0 %v479
    %521 = vmatprep.subr.bf16.mxu0 0
    %522 = vmatpush1.bf16.msra.mxu0 %v480
    %523 = vmatprep.subr.bf16.mxu0 0
    %524 = vmatpush1.bf16.msra.mxu0 %v481
    %525 = vmatprep.subr.bf16.mxu0 0
    %526 = vmatpush1.bf16.msra.mxu0 %v482
    %527 = vmatprep.subr.bf16.mxu0 0
    %528 = vmatpush1.bf16.msra.mxu0 %v483
    %529 = vmatprep.subr.bf16.mxu0 0
    %530 = vmatpush1.bf16.msra.mxu0 %v484
    %531 = vmatprep.subr.bf16.mxu0 0
    %532 = vmatpush1.bf16.msra.mxu0 %v485
    %533 = vmatprep.subr.bf16.mxu0 0
    %534 = vmatpush1.bf16.msra.mxu0 %v486
    %535 = vmatprep.mubr.bf16.mxu0 %v367
    %536 = vmatmul.mubr.bf16.gmra.mrb[0].mxu0 %v366
    %v537 = vpop.f32.mrb[0].mxu0
    %v538 = vadd.f32 %v405, %v537
    %v539 = vpop.f32.mrb[0].mxu0
    %v540 = vpop.f32.mrb[0].mxu0
    %v541 = vadd.f32 %v405, %v540
    %v542 = vpop.f32.mrb[0].mxu0
    %543 = vdwg.mxu0
    %v544 = vadd.f32 %v208, %v538
    %v545 = vadd.f32 %v209, %v541
    %v546 = vld [vmem:[%s10] sm:$0x1]
    %v547 = vld [vmem:[%s11] sm:$0x1]
    %548 = vadd.xlane.f32.xlu0 %v544
    %v549 = vpop.xlane.xlu0 %548
    %550 = vadd.xlane.f32.xlu0 %v545
    %v551 = vpop.xlane.xlu0 %550
    %v552 = vmul.f32 %v549, %v175
    %v553 = vmul.f32 %v551, %v175
    %v554 = vsub.f32 %v544, %v552
    %v555 = vsub.f32 %v545, %v553
    %v556 = vmul.f32 %v554, %v554
    %v557 = vmul.f32 %v555, %v555
    %558 = vadd.xlane.f32.xlu0 %v556
    %v559 = vpop.xlane.xlu0 %558
    %560 = vadd.xlane.f32.xlu0 %v557
    %v561 = vpop.xlane.xlu0 %560
    %v562 = vmul.f32 %v559, %v175
    %v563 = vmul.f32 %v561, %v175
    %v564 = vadd.f32 %v562, 1e-05
    %v565 = vadd.f32 %v563, 1e-05
    %v566 = vrsqrt.pop %v564
    %v567 = vrsqrt.pop %v565
    %v568 = vmul.f32 %v554, %v566
    %v569 = vmul.f32 %v555, %v567
    %v571 = vlaneseq
    %v572 = vshrl.u32 %v571, 7
    %v573 = vsub.s32 0, %v572
    %v574 = vrot.slane %v546, %v573
    %v576 = vmul.f32 %v568, %v574
    %v577 = vmul.f32 %v569, %v574
    %v579 = vlaneseq
    %v580 = vshrl.u32 %v579, 7
    %v581 = vsub.s32 0, %v580
    %v582 = vrot.slane %v547, %v581
    %v584 = vadd.f32 %v576, %v582
    %v585 = vadd.f32 %v577, %v582
    %586 = vst [vmem:[#allocation2] sm:$0xff] %v584
    %587 = vst [vmem:[#allocation2 + $0x8] sm:$0xff] %v585
    // Predicated region
    $region50: #{encoder_layer_forward.5} parent=1 // pred_check
      _
    $region51: #{encoder_layer_forward.5} parent=1 // pred_check_branch
      %589 = sbr.rel (0) target = $region53
    $region52: #{encoder_layer_forward.5} parent=1 // pred_region
      %s591 = ssub.s32 256, 256
      %592 = vsyncadd [#allocation3], %s591
      %s593 = sshll.u32 [#allocation2], 4
      %s594 = int_to_ptr.vmem [resolvable:$true] %s593
      %599 = dma.vmem_to_hbm [thread:$0]  %s594, 256, %s12, [#allocation3], 128, 128, 8
    $region53: #{encoder_layer_forward.5} parent=1 // pred_fallthru
      _
    // Predicated region
    $region54: #{encoder_layer_forward.5} parent=1 // pred_check
      _
    $region55: #{encoder_layer_forward.5} parent=1 // pred_check_branch
      %601 = sbr.rel (0) target = $region57
    $region56: #{encoder_layer_forward.5} parent=1 // pred_region
      %602 = dma.done [#allocation3], 256
    $region57: #{encoder_layer_forward.5} parent=1 // pred_fallthru
      _
    %603 = vsyncpa [#allocation3], 1

// kernel: encoder_layer_forward.4
$region0: #{encoder_layer_forward.4}
  #allocation0 [shape = 'u32[]', space=smem, size = 0x4, offset = 0x4, fixed_abs, tag = 'smem constant byte address 0x4 - core index']
  #allocation1 [shape = 'u32[144,128]{1,0:T(1,128)}', space=vmem, size = 0x12000, scoped, tag = 'internal scratch']
  %s0 = inlined_call_operand.vmem [shape: bf16[2,4,8,32], index: 0, kind: input, shape index: {}]
  %s1 = inlined_call_operand.vmem [shape: bf16[2,4,8,32], index: 1, kind: input, shape index: {}]
  %s2 = inlined_call_operand.vmem [shape: bf16[2,4,8,32], index: 2, kind: input, shape index: {}]
  %s3 = inlined_call_operand.vmem [shape: s32[2,1,8], index: 3, kind: input, shape index: {}]
  %s4 = inlined_call_operand.vmem [shape: bf16[2,4,8,32], index: 4, kind: output, shape index: {}]
  %s5 = sld [smem:[#allocation0]]
  $region49: #{encoder_layer_forward.4} parent=0
    _
  %s7 = ssub.s32 1, %s5
  %s8 = scalar_select 0, %s7, %s5
  loop: start=0, step=1, limit=4
  $region2: #{encoder_layer_forward.4} parent=0 // loop_pre_header
    _
  $region3: #{encoder_layer_forward.4} parent=0 // loop_header
    %s10 = sphi 0, %s14
    %p11 = scmp.ge.s32.totalorder %s10, 4
    %s20 = sphi 0, %s22
    %s23 = sphi 0, %s20
    %s24 = sphi 0, %s23
    %s40 = sphi 0, %s24
    %s46 = sphi 0, %s48
    %s49 = sphi 0, %s46
    %s50 = sphi 0, %s49
    %s66 = sphi 0, %s50
    %s72 = sphi 0, %s74
    %s75 = sphi 0, %s72
    %s76 = sphi 0, %s75
    %s92 = sphi 0, %s76
    %s98 = sphi 0, %s100
    %s101 = sphi 0, %s98
    %s102 = sphi 0, %s101
    %s118 = sphi 0, %s102
    %s124 = sphi 0, %s126
    %s127 = sphi 0, %s124
    %s128 = sphi 0, %s127
    %s144 = sphi 0, %s128
  $region4: #{encoder_layer_forward.4} parent=0 // loop_header_branch
    %13 = sbr.rel (%p11) target = $region8
  $region5: #{encoder_layer_forward.4} parent=0 // loop_body
    %s15 = ssub.s32 %s10, 1
    %s16 = ssub.s32 %s10, 2
    %s17 = sadd.s32 %s10, 1
    %s18 = ssub.s32 %s10, %s17
    %p19 = scmp.eq.s32.totalorder %s18, 0
    %s21 = sadd.s32 %s20, 1
    %s22 = scalar_select %p19, %s20, %s21
    %p25 = pneg %p19
    %p26 = scmp.eq.s32.totalorder %s10, 1
    %p27 = por %p25, %p26
    %p28 = scmp.ne.s32.totalorder %s20, %s23
    %p29 = scmp.eq.s32.totalorder %s10, 0
    %p30 = por %p28, %p29
    %p31 = scmp.ne.s32.totalorder %s20, %s23
    %p32 = scmp.eq.s32.totalorder %s15, 1
    %p33 = por %p31, %p32
    %p34 = scmp.ne.s32.totalorder %s23, %s24
    %p35 = scmp.eq.s32.totalorder %s15, 0
    %p36 = por %p34, %p35
    %p37 = scmp.ne.s32.totalorder %s23, %s24
    %p38 = scmp.eq.s32.totalorder %s16, 1
    %p39 = por %p37, %p38
    %p41 = scmp.ne.s32.totalorder %s24, %s40
    %p42 = scmp.eq.s32.totalorder %s16, 0
    %p43 = por %p41, %p42
    %s44 = ssub.s32 %s10, %s17
    %p45 = scmp.eq.s32.totalorder %s44, 0
    %s47 = sadd.s32 %s46, 1
    %s48 = scalar_select %p45, %s46, %s47
    %p51 = pneg %p45
    %p52 = scmp.eq.s32.totalorder %s10, 1
    %p53 = por %p51, %p52
    %p54 = scmp.ne.s32.totalorder %s46, %s49
    %p55 = scmp.eq.s32.totalorder %s10, 0
    %p56 = por %p54, %p55
    %p57 = scmp.ne.s32.totalorder %s46, %s49
    %p58 = scmp.eq.s32.totalorder %s15, 1
    %p59 = por %p57, %p58
    %p60 = scmp.ne.s32.totalorder %s49, %s50
    %p61 = scmp.eq.s32.totalorder %s15, 0
    %p62 = por %p60, %p61
    %p63 = scmp.ne.s32.totalorder %s49, %s50
    %p64 = scmp.eq.s32.totalorder %s16, 1
    %p65 = por %p63, %p64
    %p67 = scmp.ne.s32.totalorder %s50, %s66
    %p68 = scmp.eq.s32.totalorder %s16, 0
    %p69 = por %p67, %p68
    %s70 = ssub.s32 %s10, %s17
    %p71 = scmp.eq.s32.totalorder %s70, 0
    %s73 = sadd.s32 %s72, 1
    %s74 = scalar_select %p71, %s72, %s73
    %p77 = pneg %p71
    %p78 = scmp.eq.s32.totalorder %s10, 1
    %p79 = por %p77, %p78
    %p80 = scmp.ne.s32.totalorder %s72, %s75
    %p81 = scmp.eq.s32.totalorder %s10, 0
    %p82 = por %p80, %p81
    %p83 = scmp.ne.s32.totalorder %s72, %s75
    %p84 = scmp.eq.s32.totalorder %s15, 1
    %p85 = por %p83, %p84
    %p86 = scmp.ne.s32.totalorder %s75, %s76
    %p87 = scmp.eq.s32.totalorder %s15, 0
    %p88 = por %p86, %p87
    %p89 = scmp.ne.s32.totalorder %s75, %s76
    %p90 = scmp.eq.s32.totalorder %s16, 1
    %p91 = por %p89, %p90
    %p93 = scmp.ne.s32.totalorder %s76, %s92
    %p94 = scmp.eq.s32.totalorder %s16, 0
    %p95 = por %p93, %p94
    %s96 = ssub.s32 %s10, %s17
    %p97 = scmp.eq.s32.totalorder %s96, 0
    %s99 = sadd.s32 %s98, 1
    %s100 = scalar_select %p97, %s98, %s99
    %p103 = pneg %p97
    %p104 = scmp.eq.s32.totalorder %s10, 1
    %p105 = por %p103, %p104
    %p106 = scmp.ne.s32.totalorder %s98, %s101
    %p107 = scmp.eq.s32.totalorder %s10, 0
    %p108 = por %p106, %p107
    %p109 = scmp.ne.s32.totalorder %s98, %s101
    %p110 = scmp.eq.s32.totalorder %s15, 1
    %p111 = por %p109, %p110
    %p112 = scmp.ne.s32.totalorder %s101, %s102
    %p113 = scmp.eq.s32.totalorder %s15, 0
    %p114 = por %p112, %p113
    %p115 = scmp.ne.s32.totalorder %s101, %s102
    %p116 = scmp.eq.s32.totalorder %s16, 1
    %p117 = por %p115, %p116
    %p119 = scmp.ne.s32.totalorder %s102, %s118
    %p120 = scmp.eq.s32.totalorder %s16, 0
    %p121 = por %p119, %p120
    %s122 = ssub.s32 %s10, %s17
    %p123 = scmp.eq.s32.totalorder %s122, 0
    %s125 = sadd.s32 %s124, 1
    %s126 = scalar_select %p123, %s124, %s125
    %p129 = pneg %p123
    %p130 = scmp.eq.s32.totalorder %s10, 1
    %p131 = por %p129, %p130
    %p132 = scmp.ne.s32.totalorder %s124, %s127
    %p133 = scmp.eq.s32.totalorder %s10, 0
    %p134 = por %p132, %p133
    %p135 = scmp.ne.s32.totalorder %s124, %s127
    %p136 = scmp.eq.s32.totalorder %s15, 1
    %p137 = por %p135, %p136
    %p138 = scmp.ne.s32.totalorder %s127, %s128
    %p139 = scmp.eq.s32.totalorder %s15, 0
    %p140 = por %p138, %p139
    %p141 = scmp.ne.s32.totalorder %s127, %s128
    %p142 = scmp.eq.s32.totalorder %s16, 1
    %p143 = por %p141, %p142
    %p145 = scmp.ne.s32.totalorder %s128, %s144
    %p146 = scmp.eq.s32.totalorder %s16, 0
    %p147 = por %p145, %p146
    %p148 = scmp.le.s32.totalorder 1, %s10
    %p149 = scmp.lt.s32.totalorder %s10, 3
    %p150 = pnand %p148, %p149
    %p151 = pneg %p150
    // Predicated region
    $region9: #{encoder_layer_forward.4} parent=5 // pred_check
      _
    $region10: #{encoder_layer_forward.4} parent=5 // pred_check_branch
      %153 = sbr.rel (%p150) target = $region12
    $region11: #{encoder_layer_forward.4} parent=5 // pred_region
      %s154 = ssub.s32 %s10, 1
    $region12: #{encoder_layer_forward.4} parent=5 // pred_fallthru
      _
    %p155 = scmp.lt.s32.totalorder %s10, 2
    // Predicated region
    $region13: #{encoder_layer_forward.4} parent=5 // pred_check
      %p156 = pneg %p155
    $region14: #{encoder_layer_forward.4} parent=5 // pred_check_branch
      %158 = sbr.rel (%p156) target = $region16
    $region15: #{encoder_layer_forward.4} parent=5 // pred_region
      // Predicated region
      $region17: #{encoder_layer_forward.4} parent=15 // pred_check
        %p159 = pneg %p30
      $region18: #{encoder_layer_forward.4} parent=15 // pred_check_branch
        %161 = sbr.rel (%p159) target = $region20
      $region19: #{encoder_layer_forward.4} parent=15 // pred_region
        %p162 = scmp.lt.s32.totalorder %s10, 1
        %s163 = scalar_select %p162, %s10, 1
        %s164 = smul.addr %s163, 4
        %s165 = smul.addr %s164, 4
        %s166 = scalar_lea.vmem %s0, %s165
      $region20: #{encoder_layer_forward.4} parent=15 // pred_fallthru
        _
      // Predicated region
      $region21: #{encoder_layer_forward.4} parent=15 // pred_check
        %p167 = pneg %p56
      $region22: #{encoder_layer_forward.4} parent=15 // pred_check_branch
        %169 = sbr.rel (%p167) target = $region24
      $region23: #{encoder_layer_forward.4} parent=15 // pred_region
        %p170 = scmp.lt.s32.totalorder %s10, 1
        %s171 = scalar_select %p170, %s10, 1
        %s172 = smul.addr %s171, 4
        %s173 = smul.addr %s172, 4
        %s174 = scalar_lea.vmem %s1, %s173
      $region24: #{encoder_layer_forward.4} parent=15 // pred_fallthru
        _
      // Predicated region
      $region25: #{encoder_layer_forward.4} parent=15 // pred_check
        %p175 = pneg %p82
      $region26: #{encoder_layer_forward.4} parent=15 // pred_check_branch
        %177 = sbr.rel (%p175) target = $region28
      $region27: #{encoder_layer_forward.4} parent=15 // pred_region
        %p178 = scmp.lt.s32.totalorder %s10, 1
        %s179 = scalar_select %p178, %s10, 1
        %s180 = smul.addr %s179, 4
        %s181 = smul.addr %s180, 4
        %s182 = scalar_lea.vmem %s2, %s181
      $region28: #{encoder_layer_forward.4} parent=15 // pred_fallthru
        _
      // Predicated region
      $region29: #{encoder_layer_forward.4} parent=15 // pred_check
        %p183 = pneg %p108
      $region30: #{encoder_layer_forward.4} parent=15 // pred_check_branch
        %185 = sbr.rel (%p183) target = $region32
      $region31: #{encoder_layer_forward.4} parent=15 // pred_region
        %p186 = scmp.lt.s32.totalorder %s10, 1
        %s187 = scalar_select %p186, %s10, 1
        %s188 = scalar_lea.vmem %s3, %s187
      $region32: #{encoder_layer_forward.4} parent=15 // pred_fallthru
        _
    $region16: #{encoder_layer_forward.4} parent=5 // pred_fallthru
      _
    %p189 = scmp.le.s32.totalorder 1, %s10
    %p190 = scmp.lt.s32.totalorder %s10, 3
    %p191 = pnand %p189, %p190
    %p192 = pneg %p191
    // Predicated region
    $region33: #{encoder_layer_forward.4} parent=5 // pred_check
      _
    $region34: #{encoder_layer_forward.4} parent=5 // pred_check_branch
      %194 = sbr.rel (%p191) target = $region36
    $region35: #{encoder_layer_forward.4} parent=5 // pred_region
      %s195 = ssub.s32 %s10, 1
      %p196 = scmp.lt.s32.totalorder %s15, 1
      %s197 = scalar_select %p196, %s15, 1
      %s198 = smul.addr %s197, 4
      %s199 = smul.addr %s198, 4
      %s200 = scalar_lea.vmem %s0, %s199
      %p201 = pneg %p36
      %p202 = pneg %p33
      %p203 = scmp.lt.s32.totalorder %s15, 1
      %s204 = scalar_select %p203, %s15, 1
      %s205 = smul.addr %s204, 4
      %s206 = smul.addr %s205, 4
      %s207 = scalar_lea.vmem %s1, %s206
      %p208 = pneg %p62
      %p209 = pneg %p59
      %p210 = scmp.lt.s32.totalorder %s15, 1
      %s211 = scalar_select %p210, %s15, 1
      %s212 = smul.addr %s211, 4
      %s213 = smul.addr %s212, 4
      %s214 = scalar_lea.vmem %s2, %s213
      %p215 = pneg %p88
      %p216 = pneg %p85
      %p217 = scmp.lt.s32.totalorder %s15, 1
      %s218 = scalar_select %p217, %s15, 1
      %s219 = scalar_lea.vmem %s3, %s218
      %p220 = pneg %p114
      %p221 = pneg %p111
      %p222 = pneg %p140
      %p223 = pneg %p137
      %p224 = scmp.lt.s32.totalorder %s15, 1
      %s225 = scalar_select %p224, %s15, 1
      %s226 = smul.addr %s225, 4
      %s227 = smul.addr %s226, 4
      %s228 = scalar_lea.vmem %s4, %s227
      %p229 = scmp.lt.s32.totalorder %s15, 1
      %s230 = scalar_select %p229, %s15, 1
      %s231 = smul.addr %s230, 4
      %s232 = smul.addr %s231, 4
      %s233 = scalar_lea.vmem %s0, %s232
      %p234 = scmp.lt.s32.totalorder %s15, 1
      %s235 = scalar_select %p234, %s15, 1
      %s236 = smul.addr %s235, 4
      %s237 = smul.addr %s236, 4
      %s238 = scalar_lea.vmem %s1, %s237
      %p239 = scmp.lt.s32.totalorder %s15, 1
      %s240 = scalar_select %p239, %s15, 1
      %s241 = smul.addr %s240, 4
      %s242 = smul.addr %s241, 4
      %s243 = scalar_lea.vmem %s2, %s242
      %p244 = scmp.lt.s32.totalorder %s15, 1
      %s245 = scalar_select %p244, %s15, 1
      %s246 = scalar_lea.vmem %s3, %s245
      %p247 = scmp.lt.s32.totalorder %s15, 1
      %s248 = scalar_select %p247, %s15, 1
      %s249 = smul.addr %s248, 4
      %s250 = smul.addr %s249, 4
      %s251 = scalar_lea.vmem %s4, %s250
      %v253 = vld [vmem:[%s233] sm:$0xf]
      %v254 = vld [vmem:[%s233 + $0x4] sm:$0xf]
      %v255 = vld [vmem:[%s233 + $0x8] sm:$0xf]
      %v256 = vld [vmem:[%s233 + $0xc] sm:$0xf]
      %v257 = vld [vmem:[%s238] sm:$0xf]
      %v258 = vld [vmem:[%s238 + $0x4] sm:$0xf]
      %v259 = vld [vmem:[%s238 + $0x8] sm:$0xf]
      %v260 = vld [vmem:[%s238 + $0xc] sm:$0xf]
      %v261 = vld [vmem:[%s243] sm:$0xf]
      %v262 = vld [vmem:[%s243 + $0x4] sm:$0xf]
      %v263 = vld [vmem:[%s243 + $0x8] sm:$0xf]
      %v264 = vld [vmem:[%s243 + $0xc] sm:$0xf]
      %vm265 = vcmask 261120
      %v267 = vsel %vm265, %v253, 0
      %v270 = vsel %vm265, %v257, 0
      %272 = vmatprep.subr.bf16.mxu0 0
      %273 = vmatpush1.bf16.xpose.msra.mxu0 %v270
      %274 = vmatprep.subr.bf16.mxu0 0
      %275 = vmatpush1.bf16.xpose.msra.mxu0 0
      %276 = vmatprep.subr.bf16.mxu0 0
      %277 = vmatpush1.bf16.xpose.msra.mxu0 0
      %278 = vmatprep.subr.bf16.mxu0 0
      %279 = vmatpush1.bf16.xpose.msra.mxu0 0
      %280 = vmatprep.subr.bf16.mxu0 0
      %281 = vmatpush1.bf16.xpose.msra.mxu0 0
      %282 = vmatprep.subr.bf16.mxu0 0
      %283 = vmatpush1.bf16.xpose.msra.mxu0 0
      %284 = vmatprep.subr.bf16.mxu0 0
      %285 = vmatpush1.bf16.xpose.msra.mxu0 0
      %286 = vmatprep.subr.bf16.mxu0 0
      %287 = vmatpush1.bf16.xpose.msra.mxu0 0
      %288 = vmatprep.subr.bf16.mxu0 0
      %289 = vmatpush1.bf16.xpose.msra.mxu0 0
      %290 = vmatprep.subr.bf16.mxu0 0
      %291 = vmatpush1.bf16.xpose.msra.mxu0 0
      %292 = vmatprep.subr.bf16.mxu0 0
      %293 = vmatpush1.bf16.xpose.msra.mxu0 0
      %294 = vmatprep.subr.bf16.mxu0 0
      %295 = vmatpush1.bf16.xpose.msra.mxu0 0
      %296 = vmatprep.subr.bf16.mxu0 0
      %297 = vmatpush1.bf16.xpose.msra.mxu0 0
      %298 = vmatprep.subr.bf16.mxu0 0
      %299 = vmatpush1.bf16.xpose.msra.mxu0 0
      %300 = vmatprep.subr.bf16.mxu0 0
      %301 = vmatpush1.bf16.xpose.msra.mxu0 0
      %302 = vmatprep.subr.bf16.mxu0 0
      %303 = vmatpush1.bf16.xpose.msra.mxu0 0
      %304 = vmatprep.mubr.bf16.mxu0 0
      %305 = vmatmul.mubr.bf16.gmra.mrb[0].mxu0 %v267
      %v306 = vpop.f32.mrb[0].mxu0
      %v307 = vadd.f32 0.0, %v306
      %v308 = vpop.f32.mrb[0].mxu0
      %v309 = vpop.f32.mrb[0].mxu0
      %v310 = vpop.f32.mrb[0].mxu0
      %311 = vdwg.mxu0
      %v313 = vsel %vm265, %v254, 0
      %v316 = vsel %vm265, %v258, 0
      %318 = vmatprep.subr.bf16.mxu0 0
      %319 = vmatpush1.bf16.xpose.msra.mxu0 %v316
      %320 = vmatprep.subr.bf16.mxu0 0
      %321 = vmatpush1.bf16.xpose.msra.mxu0 0
      %322 = vmatprep.subr.bf16.mxu0 0
      %323 = vmatpush1.bf16.xpose.msra.mxu0 0
      %324 = vmatprep.subr.bf16.mxu0 0
      %325 = vmatpush1.bf16.xpose.msra.mxu0 0
      %326 = vmatprep.subr.bf16.mxu0 0
      %327 = vmatpush1.bf16.xpose.msra.mxu0 0
      %328 = vmatprep.subr.bf16.mxu0 0
      %329 = vmatpush1.bf16.xpose.msra.mxu0 0
      %330 = vmatprep.subr.bf16.mxu0 0
      %331 = vmatpush1.bf16.xpose.msra.mxu0 0
      %332 = vmatprep.subr.bf16.mxu0 0
      %333 = vmatpush1.bf16.xpose.msra.mxu0 0
      %334 = vmatprep.subr.bf16.mxu0 0
      %335 = vmatpush1.bf16.xpose.msra.mxu0 0
      %336 = vmatprep.subr.bf16.mxu0 0
      %337 = vmatpush1.bf16.xpose.msra.mxu0 0
      %338 = vmatprep.subr.bf16.mxu0 0
      %339 = vmatpush1.bf16.xpose.msra.mxu0 0
      %340 = vmatprep.subr.bf16.mxu0 0
      %341 = vmatpush1.bf16.xpose.msra.mxu0 0
      %342 = vmatprep.subr.bf16.mxu0 0
      %343 = vmatpush1.bf16.xpose.msra.mxu0 0
      %344 = vmatprep.subr.bf16.mxu0 0
      %345 = vmatpush1.bf16.xpose.msra.mxu0 0
      %346 = vmatprep.subr.bf16.mxu0 0
      %347 = vmatpush1.bf16.xpose.msra.mxu0 0
      %348 = vmatprep.subr.bf16.mxu0 0
      %349 = vmatpush1.bf16.xpose.msra.mxu0 0
      %350 = vmatprep.mubr.bf16.mxu0 0
      %351 = vmatmul.mubr.bf16.gmra.mrb[0].mxu0 %v313
      %v352 = vpop.f32.mrb[0].mxu0
      %v353 = vadd.f32 0.0, %v352
      %v354 = vpop.f32.mrb[0].mxu0
      %v355 = vpop.f32.mrb[0].mxu0
      %v356 = vpop.f32.mrb[0].mxu0
      %357 = vdwg.mxu0
      %v359 = vsel %vm265, %v255, 0
      %v362 = vsel %vm265, %v259, 0
      %364 = vmatprep.subr.bf16.mxu0 0
      %365 = vmatpush1.bf16.xpose.msra.mxu0 %v362
      %366 = vmatprep.subr.bf16.mxu0 0
      %367 = vmatpush1.bf16.xpose.msra.mxu0 0
      %368 = vmatprep.subr.bf16.mxu0 0
      %369 = vmatpush1.bf16.xpose.msra.mxu0 0
      %370 = vmatprep.subr.bf16.mxu0 0
      %371 = vmatpush1.bf16.xpose.msra.mxu0 0
      %372 = vmatprep.subr.bf16.mxu0 0
      %373 = vmatpush1.bf16.xpose.msra.mxu0 0
      %374 = vmatprep.subr.bf16.mxu0 0
      %375 = vmatpush1.bf16.xpose.msra.mxu0 0
      %376 = vmatprep.subr.bf16.mxu0 0
      %377 = vmatpush1.bf16.xpose.msra.mxu0 0
      %378 = vmatprep.subr.bf16.mxu0 0
      %379 = vmatpush1.bf16.xpose.msra.mxu0 0
      %380 = vmatprep.subr.bf16.mxu0 0
      %381 = vmatpush1.bf16.xpose.msra.mxu0 0
      %382 = vmatprep.subr.bf16.mxu0 0
      %383 = vmatpush1.bf16.xpose.msra.mxu0 0
      %384 = vmatprep.subr.bf16.mxu0 0
      %385 = vmatpush1.bf16.xpose.msra.mxu0 0
      %386 = vmatprep.subr.bf16.mxu0 0
      %387 = vmatpush1.bf16.xpose.msra.mxu0 0
      %388 = vmatprep.subr.bf16.mxu0 0
      %389 = vmatpush1.bf16.xpose.msra.mxu0 0
      %390 = vmatprep.subr.bf16.mxu0 0
      %391 = vmatpush1.bf16.xpose.msra.mxu0 0
      %392 = vmatprep.subr.bf16.mxu0 0
      %393 = vmatpush1.bf16.xpose.msra.mxu0 0
      %394 = vmatprep.subr.bf16.mxu0 0
      %395 = vmatpush1.bf16.xpose.msra.mxu0 0
      %396 = vmatprep.mubr.bf16.mxu0 0
      %397 = vmatmul.mubr.bf16.gmra.mrb[0].mxu0 %v359
      %v398 = vpop.f32.mrb[0].mxu0
      %v399 = vadd.f32 0.0, %v398
      %v400 = vpop.f32.mrb[0].mxu0
      %v401 = vpop.f32.mrb[0].mxu0
      %v402 = vpop.f32.mrb[0].mxu0
      %403 = vdwg.mxu0
      %v405 = vsel %vm265, %v256, 0
      %v408 = vsel %vm265, %v260, 0
      %410 = vmatprep.subr.bf16.mxu0 0
      %411 = vmatpush1.bf16.xpose.msra.mxu0 %v408
      %412 = vmatprep.subr.bf16.mxu0 0
      %413 = vmatpush1.bf16.xpose.msra.mxu0 0
      %414 = vmatprep.subr.bf16.mxu0 0
      %415 = vmatpush1.bf16.xpose.msra.mxu0 0
      %416 = vmatprep.subr.bf16.mxu0 0
      %417 = vmatpush1.bf16.xpose.msra.mxu0 0
      %418 = vmatprep.subr.bf16.mxu0 0
      %419 = vmatpush1.bf16.xpose.msra.mxu0 0
      %420 = vmatprep.subr.bf16.mxu0 0
      %421 = vmatpush1.bf16.xpose.msra.mxu0 0
      %422 = vmatprep.subr.bf16.mxu0 0
      %423 = vmatpush1.bf16.xpose.msra.mxu0 0
      %424 = vmatprep.subr.bf16.mxu0 0
      %425 = vmatpush1.bf16.xpose.msra.mxu0 0
      %426 = vmatprep.subr.bf16.mxu0 0
      %427 = vmatpush1.bf16.xpose.msra.mxu0 0
      %428 = vmatprep.subr.bf16.mxu0 0
      %429 = vmatpush1.bf16.xpose.msra.mxu0 0
      %430 = vmatprep.subr.bf16.mxu0 0
      %431 = vmatpush1.bf16.xpose.msra.mxu0 0
      %432 = vmatprep.subr.bf16.mxu0 0
      %433 = vmatpush1.bf16.xpose.msra.mxu0 0
      %434 = vmatprep.subr.bf16.mxu0 0
      %435 = vmatpush1.bf16.xpose.msra.mxu0 0
      %436 = vmatprep.subr.bf16.mxu0 0
      %437 = vmatpush1.bf16.xpose.msra.mxu0 0
      %438 = vmatprep.subr.bf16.mxu0 0
      %439 = vmatpush1.bf16.xpose.msra.mxu0 0
      %440 = vmatprep.subr.bf16.mxu0 0
      %441 = vmatpush1.bf16.xpose.msra.mxu0 0
      %442 = vmatprep.mubr.bf16.mxu0 0
      %443 = vmatmul.mubr.bf16.gmra.mrb[0].mxu0 %v405
      %v444 = vpop.f32.mrb[0].mxu0
      %v445 = vadd.f32 0.0, %v444
      %v446 = vpop.f32.mrb[0].mxu0
      %v447 = vpop.f32.mrb[0].mxu0
      %v448 = vpop.f32.mrb[0].mxu0
      %449 = vdwg.mxu0
      %v450 = vmul.f32 %v307, 0.17677669
      %v451 = vmul.f32 %v353, 0.17677669
      %v452 = vmul.f32 %v399, 0.17677669
      %v453 = vmul.f32 %v445, 0.17677669
      %v454 = vld [vmem:[%s246] sm:$0x1]
      %vm455 = vcmp.eq.s32.totalorder %v454, 0
      %v456 = vsel %vm455, 1, 0
      %v457 = vlaneseq
      %v458 = vshrl.u32 %v457, 7
      %v459 = vsub.s32 0, %v458
      %v460 = vrot.slane %v456, %v459
      %vm461 = vcmp.eq.s32.totalorder %v460, 1
      %v462 = vsel %vm461, -1e+10, %v450
      %v463 = vsel %vm461, -1e+10, %v451
      %v464 = vsel %vm461, -1e+10, %v452
      %v465 = vsel %vm461, -1e+10, %v453
      %vm466 = vcmask 64512
      %v467 = vsel %vm466, %v462, -inf
      %468 = vmax.xlane.f32.xlu0 %v467
      %v469 = vpop.xlane.xlu0 %468
      %v470 = vsel %vm466, %v463, -inf
      %471 = vmax.xlane.f32.xlu0 %v470
      %v472 = vpop.xlane.xlu0 %471
      %v473 = vsel %vm466, %v464, -inf
      %474 = vmax.xlane.f32.xlu0 %v473
      %v475 = vpop.xlane.xlu0 %474
      %v476 = vsel %vm466, %v465, -inf
      %477 = vmax.xlane.f32.xlu0 %v476
      %v478 = vpop.xlane.xlu0 %477
      %v479 = vsub.f32 %v462, %v469
      %v480 = vsub.f32 %v463, %v472
      %v481 = vsub.f32 %v464, %v475
      %v482 = vsub.f32 %v465, %v478
      %v483 = vmul.f32 %v479, 1.442695
      %v484 = vpow.pop %v483
      %v485 = vmul.f32 %v480, 1.442695
      %v486 = vpow.pop %v485
      %v487 = vmul.f32 %v481, 1.442695
      %v488 = vpow.pop %v487
      %v489 = vmul.f32 %v482, 1.442695
      %v490 = vpow.pop %v489
      %v491 = vsel %vm466, %v484, 0.0
      %492 = vadd.xlane.f32.xlu0 %v491
      %v493 = vpop.xlane.xlu0 %492
      %v494 = vsel %vm466, %v486, 0.0
      %495 = vadd.xlane.f32.xlu0 %v494
      %v496 = vpop.xlane.xlu0 %495
      %v497 = vsel %vm466, %v488, 0.0
      %498 = vadd.xlane.f32.xlu0 %v497
      %v499 = vpop.xlane.xlu0 %498
      %v500 = vsel %vm466, %v490, 0.0
      %501 = vadd.xlane.f32.xlu0 %v500
      %v502 = vpop.xlane.xlu0 %501
      %v503 = vrcp.pop %v493
      %v504 = vrcp.pop %v496
      %v505 = vrcp.pop %v499
      %v506 = vrcp.pop %v502
      %v507 = vmul.f32 %v484, %v503
      %v508 = vmul.f32 %v486, %v504
      %v509 = vmul.f32 %v488, %v505
      %v510 = vmul.f32 %v490, %v506
      %v511 = vpack.c.bf16 %v507, %v507
      %v512 = vpack.c.bf16 %v508, %v508
      %v513 = vpack.c.bf16 %v509, %v509
      %v514 = vpack.c.bf16 %v510, %v510
      %v516 = vsel %vm466, %v511, 0
      %vm518 = vcmask 1043456
      %v520 = vsel %vm518, %v261, 0
      %522 = vmatprep.subr.bf16.mxu0 0
      %523 = vmatpush1.bf16.msra.mxu0 %v520
      %524 = vmatprep.subr.bf16.mxu0 0
      %525 = vmatpush1.bf16.msra.mxu0 0
      %526 = vmatprep.subr.bf16.mxu0 0
      %527 = vmatpush1.bf16.msra.mxu0 0
      %528 = vmatprep.subr.bf16.mxu0 0
      %529 = vmatpush1.bf16.msra.mxu0 0
      %530 = vmatprep.subr.bf16.mxu0 0
      %531 = vmatpush1.bf16.msra.mxu0 0
      %532 = vmatprep.subr.bf16.mxu0 0
      %533 = vmatpush1.bf16.msra.mxu0 0
      %534 = vmatprep.subr.bf16.mxu0 0
      %535 = vmatpush1.bf16.msra.mxu0 0
      %536 = vmatprep.subr.bf16.mxu0 0
      %537 = vmatpush1.bf16.msra.mxu0 0
      %538 = vmatprep.subr.bf16.mxu0 0
      %539 = vmatpush1.bf16.msra.mxu0 0
      %540 = vmatprep.subr.bf16.mxu0 0
      %541 = vmatpush1.bf16.msra.mxu0 0
      %542 = vmatprep.subr.bf16.mxu0 0
      %543 = vmatpush1.bf16.msra.mxu0 0
      %544 = vmatprep.subr.bf16.mxu0 0
      %545 = vmatpush1.bf16.msra.mxu0 0
      %546 = vmatprep.subr.bf16.mxu0 0
      %547 = vmatpush1.bf16.msra.mxu0 0
      %548 = vmatprep.subr.bf16.mxu0 0
      %549 = vmatpush1.bf16.msra.mxu0 0
      %550 = vmatprep.subr.bf16.mxu0 0
      %551 = vmatpush1.bf16.msra.mxu0 0
      %552 = vmatprep.subr.bf16.mxu0 0
      %553 = vmatpush1.bf16.msra.mxu0 0
      %554 = vmatprep.mubr.bf16.mxu0 0
      %555 = vmatmul.mubr.bf16.gmra.mrb[0].mxu0 %v516
      %v556 = vpop.f32.mrb[0].mxu0
      %v557 = vadd.f32 0.0, %v556
      %v558 = vpop.f32.mrb[0].mxu0
      %v559 = vpop.f32.mrb[0].mxu0
      %v560 = vpop.f32.mrb[0].mxu0
      %561 = vdwg.mxu0
      %v563 = vsel %vm466, %v512, 0
      %v566 = vsel %vm518, %v262, 0
      %568 = vmatprep.subr.bf16.mxu0 0
      %569 = vmatpush1.bf16.msra.mxu0 %v566
      %570 = vmatprep.subr.bf16.mxu0 0
      %571 = vmatpush1.bf16.msra.mxu0 0
      %572 = vmatprep.subr.bf16.mxu0 0
      %573 = vmatpush1.bf16.msra.mxu0 0
      %574 = vmatprep.subr.bf16.mxu0 0
      %575 = vmatpush1.bf16.msra.mxu0 0
      %576 = vmatprep.subr.bf16.mxu0 0
      %577 = vmatpush1.bf16.msra.mxu0 0
      %578 = vmatprep.subr.bf16.mxu0 0
      %579 = vmatpush1.bf16.msra.mxu0 0
      %580 = vmatprep.subr.bf16.mxu0 0
      %581 = vmatpush1.bf16.msra.mxu0 0
      %582 = vmatprep.subr.bf16.mxu0 0
      %583 = vmatpush1.bf16.msra.mxu0 0
      %584 = vmatprep.subr.bf16.mxu0 0
      %585 = vmatpush1.bf16.msra.mxu0 0
      %586 = vmatprep.subr.bf16.mxu0 0
      %587 = vmatpush1.bf16.msra.mxu0 0
      %588 = vmatprep.subr.bf16.mxu0 0
      %589 = vmatpush1.bf16.msra.mxu0 0
      %590 = vmatprep.subr.bf16.mxu0 0
      %591 = vmatpush1.bf16.msra.mxu0 0
      %592 = vmatprep.subr.bf16.mxu0 0
      %593 = vmatpush1.bf16.msra.mxu0 0
      %594 = vmatprep.subr.bf16.mxu0 0
      %595 = vmatpush1.bf16.msra.mxu0 0
      %596 = vmatprep.subr.bf16.mxu0 0
      %597 = vmatpush1.bf16.msra.mxu0 0
      %598 = vmatprep.subr.bf16.mxu0 0
      %599 = vmatpush1.bf16.msra.mxu0 0
      %600 = vmatprep.mubr.bf16.mxu0 0
      %601 = vmatmul.mubr.bf16.gmra.mrb[0].mxu0 %v563
      %v602 = vpop.f32.mrb[0].mxu0
      %v603 = vadd.f32 0.0, %v602
      %v604 = vpop.f32.mrb[0].mxu0
      %v605 = vpop.f32.mrb[0].mxu0
      %v606 = vpop.f32.mrb[0].mxu0
      %607 = vdwg.mxu0
      %v609 = vsel %vm466, %v513, 0
      %v612 = vsel %vm518, %v263, 0
      %614 = vmatprep.subr.bf16.mxu0 0
      %615 = vmatpush1.bf16.msra.mxu0 %v612
      %616 = vmatprep.subr.bf16.mxu0 0
      %617 = vmatpush1.bf16.msra.mxu0 0
      %618 = vmatprep.subr.bf16.mxu0 0
      %619 = vmatpush1.bf16.msra.mxu0 0
      %620 = vmatprep.subr.bf16.mxu0 0
      %621 = vmatpush1.bf16.msra.mxu0 0
      %622 = vmatprep.subr.bf16.mxu0 0
      %623 = vmatpush1.bf16.msra.mxu0 0
      %624 = vmatprep.subr.bf16.mxu0 0
      %625 = vmatpush1.bf16.msra.mxu0 0
      %626 = vmatprep.subr.bf16.mxu0 0
      %627 = vmatpush1.bf16.msra.mxu0 0
      %628 = vmatprep.subr.bf16.mxu0 0
      %629 = vmatpush1.bf16.msra.mxu0 0
      %630 = vmatprep.subr.bf16.mxu0 0
      %631 = vmatpush1.bf16.msra.mxu0 0
      %632 = vmatprep.subr.bf16.mxu0 0
      %633 = vmatpush1.bf16.msra.mxu0 0
      %634 = vmatprep.subr.bf16.mxu0 0
      %635 = vmatpush1.bf16.msra.mxu0 0
      %636 = vmatprep.subr.bf16.mxu0 0
      %637 = vmatpush1.bf16.msra.mxu0 0
      %638 = vmatprep.subr.bf16.mxu0 0
      %639 = vmatpush1.bf16.msra.mxu0 0
      %640 = vmatprep.subr.bf16.mxu0 0
      %641 = vmatpush1.bf16.msra.mxu0 0
      %642 = vmatprep.subr.bf16.mxu0 0
      %643 = vmatpush1.bf16.msra.mxu0 0
      %644 = vmatprep.subr.bf16.mxu0 0
      %645 = vmatpush1.bf16.msra.mxu0 0
      %646 = vmatprep.mubr.bf16.mxu0 0
      %647 = vmatmul.mubr.bf16.gmra.mrb[0].mxu0 %v609
      %v648 = vpop.f32.mrb[0].mxu0
      %v649 = vadd.f32 0.0, %v648
      %v650 = vpop.f32.mrb[0].mxu0
      %v651 = vpop.f32.mrb[0].mxu0
      %v652 = vpop.f32.mrb[0].mxu0
      %653 = vdwg.mxu0
      %v655 = vsel %vm466, %v514, 0
      %v658 = vsel %vm518, %v264, 0
      %660 = vmatprep.subr.bf16.mxu0 0
      %661 = vmatpush1.bf16.msra.mxu0 %v658
      %662 = vmatprep.subr.bf16.mxu0 0
      %663 = vmatpush1.bf16.msra.mxu0 0
      %664 = vmatprep.subr.bf16.mxu0 0
      %665 = vmatpush1.bf16.msra.mxu0 0
      %666 = vmatprep.subr.bf16.mxu0 0
      %667 = vmatpush1.bf16.msra.mxu0 0
      %668 = vmatprep.subr.bf16.mxu0 0
      %669 = vmatpush1.bf16.msra.mxu0 0
      %670 = vmatprep.subr.bf16.mxu0 0
      %671 = vmatpush1.bf16.msra.mxu0 0
      %672 = vmatprep.subr.bf16.mxu0 0
      %673 = vmatpush1.bf16.msra.mxu0 0
      %674 = vmatprep.subr.bf16.mxu0 0
      %675 = vmatpush1.bf16.msra.mxu0 0
      %676 = vmatprep.subr.bf16.mxu0 0
      %677 = vmatpush1.bf16.msra.mxu0 0
      %678 = vmatprep.subr.bf16.mxu0 0
      %679 = vmatpush1.bf16.msra.mxu0 0
      %680 = vmatprep.subr.bf16.mxu0 0
      %681 = vmatpush1.bf16.msra.mxu0 0
      %682 = vmatprep.subr.bf16.mxu0 0
      %683 = vmatpush1.bf16.msra.mxu0 0
      %684 = vmatprep.subr.bf16.mxu0 0
      %685 = vmatpush1.bf16.msra.mxu0 0
      %686 = vmatprep.subr.bf16.mxu0 0
      %687 = vmatpush1.bf16.msra.mxu0 0
      %688 = vmatprep.subr.bf16.mxu0 0
      %689 = vmatpush1.bf16.msra.mxu0 0
      %690 = vmatprep.subr.bf16.mxu0 0
      %691 = vmatpush1.bf16.msra.mxu0 0
      %692 = vmatprep.mubr.bf16.mxu0 0
      %693 = vmatmul.mubr.bf16.gmra.mrb[0].mxu0 %v655
      %v694 = vpop.f32.mrb[0].mxu0
      %v695 = vadd.f32 0.0, %v694
      %v696 = vpop.f32.mrb[0].mxu0
      %v697 = vpop.f32.mrb[0].mxu0
      %v698 = vpop.f32.mrb[0].mxu0
      %699 = vdwg.mxu0
      %v700 = vpack.c.bf16 %v557, %v557
      %v701 = vpack.c.bf16 %v603, %v603
      %v702 = vpack.c.bf16 %v649, %v649
      %v703 = vpack.c.bf16 %v695, %v695
      %vm704 = vcmask 257024
      %705 = vst.msk [vmem:[%s251] sm:$0xf] %vm704, %v700
      %706 = vst.msk [vmem:[%s251 + $0x4] sm:$0xf] %vm704, %v701
      %707 = vst.msk [vmem:[%s251 + $0x8] sm:$0xf] %vm704, %v702
      %708 = vst.msk [vmem:[%s251 + $0xc] sm:$0xf] %vm704, %v703
      %p709 = scmp.lt.s32.totalorder %s15, 1
      %s710 = scalar_select %p709, %s15, 1
      %s711 = smul.addr %s710, 4
      %s712 = smul.addr %s711, 4
      %s713 = scalar_lea.vmem %s4, %s712
      // Predicated region
      $region37: #{encoder_layer_forward.4} parent=35 // pred_check
        %p714 = pneg %p137
      $region38: #{encoder_layer_forward.4} parent=35 // pred_check_branch
        %716 = sbr.rel (%p714) target = $region40
      $region39: #{encoder_layer_forward.4} parent=35 // pred_region
        _
      $region40: #{encoder_layer_forward.4} parent=35 // pred_fallthru
        _
    $region36: #{encoder_layer_forward.4} parent=5 // pred_fallthru
      _
    %p717 = scmp.le.s32.totalorder 2, %s10
    // Predicated region
    $region41: #{encoder_layer_forward.4} parent=5 // pred_check
      %p718 = pneg %p717
    $region42: #{encoder_layer_forward.4} parent=5 // pred_check_branch
      %720 = sbr.rel (%p718) target = $region44
    $region43: #{encoder_layer_forward.4} parent=5 // pred_region
      %s721 = ssub.s32 %s10, 2
      // Predicated region
      $region45: #{encoder_layer_forward.4} parent=43 // pred_check
        %p722 = pneg %p143
      $region46: #{encoder_layer_forward.4} parent=43 // pred_check_branch
        %724 = sbr.rel (%p722) target = $region48
      $region47: #{encoder_layer_forward.4} parent=43 // pred_region
        %p725 = scmp.lt.s32.totalorder %s16, 1
        %s726 = scalar_select %p725, %s16, 1
        %s727 = smul.addr %s726, 4
        %s728 = smul.addr %s727, 4
        %s729 = scalar_lea.vmem %s4, %s728
      $region48: #{encoder_layer_forward.4} parent=43 // pred_fallthru
        _
    $region44: #{encoder_layer_forward.4} parent=5 // pred_fallthru
      _
  $region6: #{encoder_layer_forward.4} parent=0 // loop_footer
    %s14 = sadd.s32 1, %s10
  $region7: #{encoder_layer_forward.4} parent=0 // loop_footer_branch
    %9 = sbr.rel target = $region3
  $region8: #{encoder_layer_forward.4} parent=0 // loop_exit
    _

</llo_original>
